<compile_context>
chip_gen: v7x
topology: tpu7x:2x2x1
jax: 0.10.0
libtpu: 0.0.40
codegen_flags: <defaults>
</compile_context>

<pallas_src>
import functools

import jax
import jax.numpy as jnp
from jax.experimental import pallas as pl
from jax.experimental.pallas import tpu as pltpu


# ------------------------------ small helpers --------------------------------

def _round_up(n, m):
    return ((n + m - 1) // m) * m


def _fold_bn(gamma, beta, mean, var, eps=1e-5):
    scale = gamma * jax.lax.rsqrt(var + eps)
    return scale, beta - mean * scale


def _pad_vec(v, n):
    return jnp.pad(v, (0, n - v.shape[0]))


def _pad_mat(m, r, c):
    return jnp.pad(m, ((0, r - m.shape[0]), (0, c - m.shape[1])))


def _pad_conv_w(w, cout, cin, cout_p, cin_p):
    # (cout, 9*cin) -> (cout_p, 9*cin_p), column order (tap, cin) preserved.
    w = w.reshape(cout, 9, cin)
    w = jnp.pad(w, ((0, cout_p - cout), (0, 0), (0, cin_p - cin)))
    return w.reshape(cout_p, 9 * cin_p)


def _edge_masks(H, W, Bc):
    """(8, Bc*H*W) f32 validity mask per non-center 3x3 tap, tiled per image."""
    p = jnp.arange(H * W, dtype=jnp.int32)
    row, col = p // W, p % W
    masks = []
    for di in (-1, 0, 1):
        for dj in (-1, 0, 1):
            if di == 0 and dj == 0:
                continue
            valid = ((row + di >= 0) & (row + di < H) &
                     (col + dj >= 0) & (col + dj < W))
            masks.append(valid)
    m = jnp.stack(masks, axis=0).astype(jnp.float32)          # (8, HW)
    return jnp.tile(m, (1, Bc))                               # (8, Bc*HW)


def _pool_matrix(H, W, Bc):
    """Block-diagonal (Bc*HW, Bc*Ho*Wo) bf16 average-pool-2x2 matrix (per image)."""
    Ho, Wo = H // 2, W // 2
    p = jnp.arange(H * W, dtype=jnp.int32)
    tgt = ((p // W) // 2) * Wo + (p % W) // 2
    q = jnp.arange(Ho * Wo, dtype=jnp.int32)
    P = (tgt[:, None] == q[None, :]).astype(jnp.float32) * 0.25
    if Bc > 1:
        P = jnp.kron(jnp.eye(Bc, dtype=jnp.float32), P)
    return P.astype(jnp.bfloat16)


# ------------------------------ Pallas kernel ---------------------------------

def _make_group_kernel(cfgs, W_hi, W_lo, L_hi, L_lo, downsample, need_lo):
    """Whole-ResnetGroup kernel; activations laid out lane-dense as (C_pad, Bc*H*W)."""

    def _conv3x3(a, w_ref, masks, W_img, L):
        # a: (C, L) f32; w_ref: (Cout, 9*C) bf16; masks: (8, L) f32.  3x3, s1, zero pad 1.
        taps = []
        t = 0
        for di in (-1, 0, 1):
            for dj in (-1, 0, 1):
                s = di * W_img + dj
                if s == 0:
                    taps.append(a)
                    continue
                # rolled[:, p] == a[:, (p + s) % L]; out-of-image positions zeroed by mask
                # (also kills wrap-around across the images folded into the lane axis).
                rolled = pltpu.roll(a, shift=(-s) % L, axis=1)
                taps.append(rolled * masks[t:t + 1, :])
                t += 1
        patches = jnp.concatenate(taps, axis=0).astype(jnp.bfloat16)   # (9*C, L) bf16
        return jnp.dot(w_ref[...], patches, preferred_element_type=jnp.float32)

    def kernel(*refs):
        refs = list(refs)
        x_ref = refs.pop(0)
        masks_hi = refs.pop(0)[...]
        masks_lo = refs.pop(0)[...] if need_lo else None
        pool = refs.pop(0)[...] if downsample else None
        o_ref = refs.pop()                                     # output is last

        a = x_ref[0]                                           # (cin0_p, L_hi) f32
        for i, cfg in enumerate(cfgs):
            bn_ref = refs.pop(0)
            w0_ref = refs.pop(0)
            w1_ref = refs.pop(0)
            wr_ref = refs.pop(0) if cfg["reduce"] else None
            cin_p, cout_p = cfg["cin_p"], cfg["cout_p"]

            if i == 0 or not downsample:
                masks, W_img, L = masks_hi, W_hi, L_hi
            else:
                masks, W_img, L = masks_lo, W_lo, L_lo

            bn = bn_ref[...]                                   # (2*(cin_p+cout_p), 1) f32
            s0 = bn[0:cin_p]
            b0 = bn[cin_p:2 * cin_p]
            s1 = bn[2 * cin_p:2 * cin_p + cout_p]
            b1 = bn[2 * cin_p + cout_p:]

            y = jnp.maximum(a * s0 + b0, 0.0)                  # bn0 + ReLU
            y = _conv3x3(y, w0_ref, masks, W_img, L)           # conv0
            y = jnp.maximum(y * s1 + b1, 0.0)                  # bn1 + ReLU
            # Dropout2d: identity in eval mode.
            y = _conv3x3(y, w1_ref, masks, W_img, L)           # conv1

            if cfg["reduce"]:
                xr = jnp.dot(wr_ref[...], a.astype(jnp.bfloat16),
                             preferred_element_type=jnp.float32)
            else:
                xr = a
            a = xr + y                                         # residual add (f32)

            if i == 0 and downsample:
                # avg_pool(x)+avg_pool(y) == avg_pool(x+y): one lane-dense bf16 matmul.
                a = jnp.dot(a.astype(jnp.bfloat16), pool,
                            preferred_element_type=jnp.float32)
        o_ref[0] = a

    return kernel


# ------------------------------ module wrapper ---------------------------------

@functools.partial(jax.jit, static_argnames=("stride",))
def resnet_group_forward(params, x_nchw, stride):
    """ResnetGroup.forward: NCHW in -> NCHW out (eval-mode BN, ReLU activation)."""
    B, C, H, W = x_nchw.shape
    n = len(params)
    downsample = stride > 1
    Ho, Wo = (H // 2, W // 2) if downsample else (H, W)
    final_hw = Ho * Wo
    need_lo = downsample and n > 1

    # Fold a batch chunk into the lane axis so every block (incl. post-pool) is lane-dense
    # (>=128 lanes).  Smallest divisor of B that reaches 128 lanes after downsampling.
    Bc = B
    for d in range(1, B + 1):
        if B % d == 0 and d * final_hw >= 128:
            Bc = d
            break
    nchunks = B // Bc
    L_hi, L_lo = Bc * H * W, Bc * final_hw

    cin0_p = _round_up(C, 8)
    x = x_nchw.astype(jnp.float32).reshape(B, C, H * W)
    x = jnp.pad(x, ((0, 0), (0, cin0_p - C), (0, 0)))
    x = x.reshape(nchunks, Bc, cin0_p, H * W).transpose(0, 2, 1, 3)
    x = x.reshape(nchunks, cin0_p, L_hi)                       # (chunks, C_pad, Bc*H*W)

    def rep(arr):
        shp = arr.shape
        return pl.BlockSpec(shp, lambda g, _s=shp: tuple(0 for _ in _s))

    inputs = [x]
    in_specs = [pl.BlockSpec((1, cin0_p, L_hi), lambda g: (g, 0, 0))]

    masks_hi = _edge_masks(H, W, Bc)
    inputs.append(masks_hi)
    in_specs.append(rep(masks_hi))
    if need_lo:
        masks_lo = _edge_masks(Ho, Wo, Bc)
        inputs.append(masks_lo)
        in_specs.append(rep(masks_lo))
    if downsample:
        pm = _pool_matrix(H, W, Bc)
        inputs.append(pm)
        in_specs.append(rep(pm))

    cfgs = []
    cur_cin = C
    for blk in params:
        cout = blk["w1"].shape[0]
        cin_p, cout_p = _round_up(cur_cin, 8), _round_up(cout, 8)
        reduce = "wr" in blk
        s0, b0 = _fold_bn(blk["bn0_gamma"], blk["bn0_beta"], blk["bn0_mean"], blk["bn0_var"])
        s1, b1 = _fold_bn(blk["bn1_gamma"], blk["bn1_beta"], blk["bn1_mean"], blk["bn1_var"])
        bn_pack = jnp.concatenate([_pad_vec(s0, cin_p), _pad_vec(b0, cin_p),
                                   _pad_vec(s1, cout_p), _pad_vec(b1, cout_p)]
                                  ).reshape(-1, 1)             # (2*(cin_p+cout_p), 1) f32
        w0 = _pad_conv_w(blk["w0"], cout, cur_cin, cout_p, cin_p).astype(jnp.bfloat16)
        w1 = _pad_conv_w(blk["w1"], cout, cout, cout_p, cout_p).astype(jnp.bfloat16)
        inputs += [bn_pack, w0, w1]
        in_specs += [rep(bn_pack), rep(w0), rep(w1)]
        if reduce:
            wr = _pad_mat(blk["wr"], cout_p, cin_p).astype(jnp.bfloat16)
            inputs.append(wr)
            in_specs.append(rep(wr))
        cfgs.append(dict(cin_p=cin_p, cout_p=cout_p, reduce=reduce))
        cur_cin = cout

    cout_f = cur_cin
    cout_fp = _round_up(cout_f, 8)
    L_out = L_lo if downsample else L_hi

    kernel = _make_group_kernel(cfgs, W, Wo, L_hi, L_lo, downsample, need_lo)
    out = pl.pallas_call(
        kernel,
        out_shape=jax.ShapeDtypeStruct((nchunks, cout_fp, L_out), jnp.float32),
        grid=(nchunks,),
        in_specs=in_specs,
        out_specs=pl.BlockSpec((1, cout_fp, L_out), lambda g: (g, 0, 0)),
        compiler_params=pltpu.CompilerParams(
            dimension_semantics=("parallel",),
            vmem_limit_bytes=32 * 1024 * 1024),
    )(*inputs)

    out = out.reshape(nchunks, cout_fp, Bc, final_hw).transpose(0, 2, 1, 3)
    out = out.reshape(B, cout_fp, Ho, Wo)
    return out[:, :cout_f]


def init_resnet_group_params(key, n, ni, no):
    """Synthetic weights matching ResnetGroup(n, ni, no, ...) structure.

    Conv weights are stored as im2col matrices (Cout, 9*Cin) with column order
    (kh, kw, Cin); conv_reduce as (Cout, Cin).  BN params are eval-mode running stats.
    """
    blocks = []
    in_plane = ni
    for _ in range(n):
        key, *ks = jax.random.split(key, 12)
        blk = {
            "bn0_gamma": 1.0 + 0.1 * jax.random.normal(ks[0], (in_plane,), jnp.float32),
            "bn0_beta": 0.1 * jax.random.normal(ks[1], (in_plane,), jnp.float32),
            "bn0_mean": 0.1 * jax.random.normal(ks[2], (in_plane,), jnp.float32),
            "bn0_var": 0.5 + jax.random.uniform(ks[3], (in_plane,), jnp.float32),
            "w0": 0.1 * jax.random.normal(ks[4], (no, 9 * in_plane), jnp.float32),
            "bn1_gamma": 1.0 + 0.1 * jax.random.normal(ks[5], (no,), jnp.float32),
            "bn1_beta": 0.1 * jax.random.normal(ks[6], (no,), jnp.float32),
            "bn1_mean": 0.1 * jax.random.normal(ks[7], (no,), jnp.float32),
            "bn1_var": 0.5 + jax.random.uniform(ks[8], (no,), jnp.float32),
            "w1": 0.1 * jax.random.normal(ks[9], (no, 9 * no), jnp.float32),
        }
        if in_plane != no:
            blk["wr"] = 0.1 * jax.random.normal(ks[10], (no, in_plane), jnp.float32)
        blocks.append(blk)
        in_plane = no
    return blocks


# ------------------------------ pure-JAX reference ------------------------------

def _conv3x3_ref(x_nhwc, w_flat, cin, cout):
    w4 = w_flat.reshape(cout, 3, 3, cin).transpose(1, 2, 3, 0)       # HWIO
    return jax.lax.conv_general_dilated(
        x_nhwc, w4, window_strides=(1, 1), padding="SAME",
        dimension_numbers=("NHWC", "HWIO", "NHWC"))


def _reference_block(blk, x, stride):
    cin = x.shape[-1]
    cout = blk["w1"].shape[0]
    s0, b0 = _fold_bn(blk["bn0_gamma"], blk["bn0_beta"], blk["bn0_mean"], blk["bn0_var"])
    s1, b1 = _fold_bn(blk["bn1_gamma"], blk["bn1_beta"], blk["bn1_mean"], blk["bn1_var"])
    y = jnp.maximum(x * s0 + b0, 0.0)
    y = _conv3x3_ref(y, blk["w0"], cin, cout)
    y = jnp.maximum(y * s1 + b1, 0.0)
    # dropout: identity (eval mode)
    y = _conv3x3_ref(y, blk["w1"], cout, cout)
    xr = jnp.einsum("bhwc,oc->bhwo", x, blk["wr"]) if "wr" in blk else x
    s = xr + y
    if stride > 1:
        B, H, W, C = s.shape
        s = s.reshape(B, H // 2, 2, W // 2, 2, C).mean(axis=(2, 4))
    return s


def _reference_forward(params, x_nchw, stride):
    x = jnp.transpose(x_nchw, (0, 2, 3, 1)).astype(jnp.float32)      # NHWC
    for i, blk in enumerate(params):
        x = _reference_block(blk, x, stride if i == 0 else 1)
    return jnp.transpose(x, (0, 3, 1, 2))                            # back to NCHW


# ----------------------------------- main ---------------------------------------

if __name__ == "__main__":
    key = jax.random.PRNGKey(0)
    kx, kp = jax.random.split(key)

    B, CIN, H, W = 2, 4, 16, 16          # NCHW, like PyTorch
    N_BLOCKS, COUT, STRIDE = 2, 8, 2     # ResnetGroup(n=2, ni=4, no=8, stride=2, ReLU)

    x = jax.random.normal(kx, (B, CIN, H, W), jnp.float32)
    params = init_resnet_group_params(kp, N_BLOCKS, CIN, COUT)

    out = resnet_group_forward(params, x, stride=STRIDE)
    jax.block_until_ready(out)

    ref = _reference_forward(params, x, STRIDE)
    assert out.shape == ref.shape == (B, COUT, H // 2, W // 2), (out.shape, ref.shape)
    max_err = float(jnp.max(jnp.abs(out - ref)))
    # Kernel uses bf16 MXU operands (f32 accumulation); f32 reference tolerance sized
    # for two blocks of K=72 bf16 matmuls (estimated max abs err ~3e-2 at these scales).
    assert jnp.allclose(out, ref, atol=5e-2, rtol=5e-2), f"max abs err {max_err}"

    print("KERNEL_OK")
</pallas_src>

<mosaic_0001>
module attributes {stable_mosaic.version = 11 : i64} {
  func.func @kernel(%arg0: i32, %arg1: memref<1x8x512xf32, #tpu.memory_space<vmem>>, %arg2: memref<8x512xf32, #tpu.memory_space<vmem>>, %arg3: memref<8x128xf32, #tpu.memory_space<vmem>>, %arg4: memref<512x128xbf16, #tpu.memory_space<vmem>>, %arg5: memref<32x1xf32, #tpu.memory_space<vmem>>, %arg6: memref<8x72xbf16, #tpu.memory_space<vmem>>, %arg7: memref<8x72xbf16, #tpu.memory_space<vmem>>, %arg8: memref<8x8xbf16, #tpu.memory_space<vmem>>, %arg9: memref<32x1xf32, #tpu.memory_space<vmem>>, %arg10: memref<8x72xbf16, #tpu.memory_space<vmem>>, %arg11: memref<8x72xbf16, #tpu.memory_space<vmem>>, %arg12: memref<1x8x128xf32, #tpu.memory_space<vmem>>) attributes {dimension_semantics = [#tpu.dimension_semantics<parallel>], iteration_bounds = array<i64: 1>, scalar_prefetch = 0 : i64, scratch_operands = 0 : i64, tpu.core_type = #tpu.core_type<tc>, window_params = [{transform_indices = @transform_0, window_bounds = array<i64: 1, 8, 512>}, {pipeline_mode = #tpu.pipeline_mode<synchronous>, transform_indices = @transform_1, window_bounds = array<i64: 8, 512>}, {pipeline_mode = #tpu.pipeline_mode<synchronous>, transform_indices = @transform_2, window_bounds = array<i64: 8, 128>}, {pipeline_mode = #tpu.pipeline_mode<synchronous>, transform_indices = @transform_3, window_bounds = array<i64: 512, 128>}, {pipeline_mode = #tpu.pipeline_mode<synchronous>, transform_indices = @transform_4, window_bounds = array<i64: 32, 1>}, {pipeline_mode = #tpu.pipeline_mode<synchronous>, transform_indices = @transform_5, window_bounds = array<i64: 8, 72>}, {pipeline_mode = #tpu.pipeline_mode<synchronous>, transform_indices = @transform_6, window_bounds = array<i64: 8, 72>}, {pipeline_mode = #tpu.pipeline_mode<synchronous>, transform_indices = @transform_7, window_bounds = array<i64: 8, 8>}, {pipeline_mode = #tpu.pipeline_mode<synchronous>, transform_indices = @transform_8, window_bounds = array<i64: 32, 1>}, {pipeline_mode = #tpu.pipeline_mode<synchronous>, transform_indices = @transform_9, window_bounds = array<i64: 8, 72>}, {pipeline_mode = #tpu.pipeline_mode<synchronous>, transform_indices = @transform_10, window_bounds = array<i64: 8, 72>}, {transform_indices = @transform_11, window_bounds = array<i64: 1, 8, 128>}]} {
    %c0 = arith.constant 0 : index
    %c0_0 = arith.constant 0 : index
    %0 = vector.load %arg2[%c0, %c0_0] : memref<8x512xf32, #tpu.memory_space<vmem>>, vector<8x512xf32>
    %c0_1 = arith.constant 0 : index
    %c0_2 = arith.constant 0 : index
    %1 = vector.load %arg3[%c0_1, %c0_2] : memref<8x128xf32, #tpu.memory_space<vmem>>, vector<8x128xf32>
    %c0_3 = arith.constant 0 : index
    %c0_4 = arith.constant 0 : index
    %2 = vector.load %arg4[%c0_3, %c0_4] : memref<512x128xbf16, #tpu.memory_space<vmem>>, vector<512x128xbf16>
    %c0_5 = arith.constant 0 : index
    %c0_6 = arith.constant 0 : index
    %c0_7 = arith.constant 0 : index
    %3 = vector.load %arg1[%c0_5, %c0_6, %c0_7] : memref<1x8x512xf32, #tpu.memory_space<vmem>>, vector<1x8x512xf32>
    %4 = vector.shape_cast %3 : vector<1x8x512xf32> to vector<8x512xf32>
    %c0_8 = arith.constant 0 : index
    %c0_9 = arith.constant 0 : index
    %5 = vector.load %arg5[%c0_8, %c0_9] : memref<32x1xf32, #tpu.memory_space<vmem>>, vector<32x1xf32>
    %6 = vector.extract_strided_slice %5 {offsets = [0, 0], sizes = [8, 1], strides = [1, 1]} : vector<32x1xf32> to vector<8x1xf32>
    %7 = vector.extract_strided_slice %5 {offsets = [8, 0], sizes = [8, 1], strides = [1, 1]} : vector<32x1xf32> to vector<8x1xf32>
    %8 = vector.extract_strided_slice %5 {offsets = [16, 0], sizes = [8, 1], strides = [1, 1]} : vector<32x1xf32> to vector<8x1xf32>
    %9 = vector.extract_strided_slice %5 {offsets = [24, 0], sizes = [8, 1], strides = [1, 1]} : vector<32x1xf32> to vector<8x1xf32>
    %10 = vector.broadcast %6 : vector<8x1xf32> to vector<8x512xf32>
    %11 = arith.mulf %4, %10 : vector<8x512xf32>
    %12 = vector.broadcast %7 : vector<8x1xf32> to vector<8x512xf32>
    %13 = arith.addf %11, %12 : vector<8x512xf32>
    %cst = arith.constant 0.000000e+00 : f32
    %14 = vector.broadcast %cst : f32 to vector<8x512xf32>
    %15 = arith.maximumf %13, %14 : vector<8x512xf32>
    %c17_i32 = arith.constant 17 : i32
    %16 = tpu.dynamic_rotate %15 by %c17_i32 dim 1 : vector<8x512xf32>, i32 -> vector<8x512xf32>
    %17 = vector.extract_strided_slice %0 {offsets = [0, 0], sizes = [1, 512], strides = [1, 1]} : vector<8x512xf32> to vector<1x512xf32>
    %18 = vector.broadcast %17 : vector<1x512xf32> to vector<8x512xf32>
    %19 = arith.mulf %16, %18 : vector<8x512xf32>
    %c16_i32 = arith.constant 16 : i32
    %20 = tpu.dynamic_rotate %15 by %c16_i32 dim 1 : vector<8x512xf32>, i32 -> vector<8x512xf32>
    %21 = vector.extract_strided_slice %0 {offsets = [1, 0], sizes = [1, 512], strides = [1, 1]} : vector<8x512xf32> to vector<1x512xf32>
    %22 = vector.broadcast %21 : vector<1x512xf32> to vector<8x512xf32>
    %23 = arith.mulf %20, %22 : vector<8x512xf32>
    %c15_i32 = arith.constant 15 : i32
    %24 = tpu.dynamic_rotate %15 by %c15_i32 dim 1 : vector<8x512xf32>, i32 -> vector<8x512xf32>
    %25 = vector.extract_strided_slice %0 {offsets = [2, 0], sizes = [1, 512], strides = [1, 1]} : vector<8x512xf32> to vector<1x512xf32>
    %26 = vector.broadcast %25 : vector<1x512xf32> to vector<8x512xf32>
    %27 = arith.mulf %24, %26 : vector<8x512xf32>
    %c1_i32 = arith.constant 1 : i32
    %28 = tpu.dynamic_rotate %15 by %c1_i32 dim 1 : vector<8x512xf32>, i32 -> vector<8x512xf32>
    %29 = vector.extract_strided_slice %0 {offsets = [3, 0], sizes = [1, 512], strides = [1, 1]} : vector<8x512xf32> to vector<1x512xf32>
    %30 = vector.broadcast %29 : vector<1x512xf32> to vector<8x512xf32>
    %31 = arith.mulf %28, %30 : vector<8x512xf32>
    %c511_i32 = arith.constant 511 : i32
    %32 = tpu.dynamic_rotate %15 by %c511_i32 dim 1 : vector<8x512xf32>, i32 -> vector<8x512xf32>
    %33 = vector.extract_strided_slice %0 {offsets = [4, 0], sizes = [1, 512], strides = [1, 1]} : vector<8x512xf32> to vector<1x512xf32>
    %34 = vector.broadcast %33 : vector<1x512xf32> to vector<8x512xf32>
    %35 = arith.mulf %32, %34 : vector<8x512xf32>
    %c497_i32 = arith.constant 497 : i32
    %36 = tpu.dynamic_rotate %15 by %c497_i32 dim 1 : vector<8x512xf32>, i32 -> vector<8x512xf32>
    %37 = vector.extract_strided_slice %0 {offsets = [5, 0], sizes = [1, 512], strides = [1, 1]} : vector<8x512xf32> to vector<1x512xf32>
    %38 = vector.broadcast %37 : vector<1x512xf32> to vector<8x512xf32>
    %39 = arith.mulf %36, %38 : vector<8x512xf32>
    %c496_i32 = arith.constant 496 : i32
    %40 = tpu.dynamic_rotate %15 by %c496_i32 dim 1 : vector<8x512xf32>, i32 -> vector<8x512xf32>
    %41 = vector.extract_strided_slice %0 {offsets = [6, 0], sizes = [1, 512], strides = [1, 1]} : vector<8x512xf32> to vector<1x512xf32>
    %42 = vector.broadcast %41 : vector<1x512xf32> to vector<8x512xf32>
    %43 = arith.mulf %40, %42 : vector<8x512xf32>
    %c495_i32 = arith.constant 495 : i32
    %44 = tpu.dynamic_rotate %15 by %c495_i32 dim 1 : vector<8x512xf32>, i32 -> vector<8x512xf32>
    %45 = vector.extract_strided_slice %0 {offsets = [7, 0], sizes = [1, 512], strides = [1, 1]} : vector<8x512xf32> to vector<1x512xf32>
    %46 = vector.broadcast %45 : vector<1x512xf32> to vector<8x512xf32>
    %47 = arith.mulf %44, %46 : vector<8x512xf32>
    %48 = tpu.concatenate %19, %23, %27, %31, %15, %35, %39, %43, %47 in 0 : vector<8x512xf32>, vector<8x512xf32>, vector<8x512xf32>, vector<8x512xf32>, vector<8x512xf32>, vector<8x512xf32>, vector<8x512xf32>, vector<8x512xf32>, vector<8x512xf32> -> vector<72x512xf32>
    %49 = arith.truncf %48 : vector<72x512xf32> to vector<72x512xbf16>
    %c0_10 = arith.constant 0 : index
    %c0_11 = arith.constant 0 : index
    %50 = vector.load %arg6[%c0_10, %c0_11] : memref<8x72xbf16, #tpu.memory_space<vmem>>, vector<8x72xbf16>
    %cst_12 = arith.constant dense<0.000000e+00> : vector<8x512xf32>
    %51 = tpu.matmul %50, %49, %cst_12 {dimension_numbers = #tpu.dot_dimension_numbers<[1], [0], [0], [1], [0, 0, 1, 1], [], []>} : vector<8x72xbf16>, vector<72x512xbf16>, vector<8x512xf32> -> vector<8x512xf32>
    %52 = vector.broadcast %8 : vector<8x1xf32> to vector<8x512xf32>
    %53 = arith.mulf %51, %52 : vector<8x512xf32>
    %54 = vector.broadcast %9 : vector<8x1xf32> to vector<8x512xf32>
    %55 = arith.addf %53, %54 : vector<8x512xf32>
    %cst_13 = arith.constant 0.000000e+00 : f32
    %56 = vector.broadcast %cst_13 : f32 to vector<8x512xf32>
    %57 = arith.maximumf %55, %56 : vector<8x512xf32>
    %c17_i32_14 = arith.constant 17 : i32
    %58 = tpu.dynamic_rotate %57 by %c17_i32_14 dim 1 : vector<8x512xf32>, i32 -> vector<8x512xf32>
    %59 = vector.extract_strided_slice %0 {offsets = [0, 0], sizes = [1, 512], strides = [1, 1]} : vector<8x512xf32> to vector<1x512xf32>
    %60 = vector.broadcast %59 : vector<1x512xf32> to vector<8x512xf32>
    %61 = arith.mulf %58, %60 : vector<8x512xf32>
    %c16_i32_15 = arith.constant 16 : i32
    %62 = tpu.dynamic_rotate %57 by %c16_i32_15 dim 1 : vector<8x512xf32>, i32 -> vector<8x512xf32>
    %63 = vector.extract_strided_slice %0 {offsets = [1, 0], sizes = [1, 512], strides = [1, 1]} : vector<8x512xf32> to vector<1x512xf32>
    %64 = vector.broadcast %63 : vector<1x512xf32> to vector<8x512xf32>
    %65 = arith.mulf %62, %64 : vector<8x512xf32>
    %c15_i32_16 = arith.constant 15 : i32
    %66 = tpu.dynamic_rotate %57 by %c15_i32_16 dim 1 : vector<8x512xf32>, i32 -> vector<8x512xf32>
    %67 = vector.extract_strided_slice %0 {offsets = [2, 0], sizes = [1, 512], strides = [1, 1]} : vector<8x512xf32> to vector<1x512xf32>
    %68 = vector.broadcast %67 : vector<1x512xf32> to vector<8x512xf32>
    %69 = arith.mulf %66, %68 : vector<8x512xf32>
    %c1_i32_17 = arith.constant 1 : i32
    %70 = tpu.dynamic_rotate %57 by %c1_i32_17 dim 1 : vector<8x512xf32>, i32 -> vector<8x512xf32>
    %71 = vector.extract_strided_slice %0 {offsets = [3, 0], sizes = [1, 512], strides = [1, 1]} : vector<8x512xf32> to vector<1x512xf32>
    %72 = vector.broadcast %71 : vector<1x512xf32> to vector<8x512xf32>
    %73 = arith.mulf %70, %72 : vector<8x512xf32>
    %c511_i32_18 = arith.constant 511 : i32
    %74 = tpu.dynamic_rotate %57 by %c511_i32_18 dim 1 : vector<8x512xf32>, i32 -> vector<8x512xf32>
    %75 = vector.extract_strided_slice %0 {offsets = [4, 0], sizes = [1, 512], strides = [1, 1]} : vector<8x512xf32> to vector<1x512xf32>
    %76 = vector.broadcast %75 : vector<1x512xf32> to vector<8x512xf32>
    %77 = arith.mulf %74, %76 : vector<8x512xf32>
    %c497_i32_19 = arith.constant 497 : i32
    %78 = tpu.dynamic_rotate %57 by %c497_i32_19 dim 1 : vector<8x512xf32>, i32 -> vector<8x512xf32>
    %79 = vector.extract_strided_slice %0 {offsets = [5, 0], sizes = [1, 512], strides = [1, 1]} : vector<8x512xf32> to vector<1x512xf32>
    %80 = vector.broadcast %79 : vector<1x512xf32> to vector<8x512xf32>
    %81 = arith.mulf %78, %80 : vector<8x512xf32>
    %c496_i32_20 = arith.constant 496 : i32
    %82 = tpu.dynamic_rotate %57 by %c496_i32_20 dim 1 : vector<8x512xf32>, i32 -> vector<8x512xf32>
    %83 = vector.extract_strided_slice %0 {offsets = [6, 0], sizes = [1, 512], strides = [1, 1]} : vector<8x512xf32> to vector<1x512xf32>
    %84 = vector.broadcast %83 : vector<1x512xf32> to vector<8x512xf32>
    %85 = arith.mulf %82, %84 : vector<8x512xf32>
    %c495_i32_21 = arith.constant 495 : i32
    %86 = tpu.dynamic_rotate %57 by %c495_i32_21 dim 1 : vector<8x512xf32>, i32 -> vector<8x512xf32>
    %87 = vector.extract_strided_slice %0 {offsets = [7, 0], sizes = [1, 512], strides = [1, 1]} : vector<8x512xf32> to vector<1x512xf32>
    %88 = vector.broadcast %87 : vector<1x512xf32> to vector<8x512xf32>
    %89 = arith.mulf %86, %88 : vector<8x512xf32>
    %90 = tpu.concatenate %61, %65, %69, %73, %57, %77, %81, %85, %89 in 0 : vector<8x512xf32>, vector<8x512xf32>, vector<8x512xf32>, vector<8x512xf32>, vector<8x512xf32>, vector<8x512xf32>, vector<8x512xf32>, vector<8x512xf32>, vector<8x512xf32> -> vector<72x512xf32>
    %91 = arith.truncf %90 : vector<72x512xf32> to vector<72x512xbf16>
    %c0_22 = arith.constant 0 : index
    %c0_23 = arith.constant 0 : index
    %92 = vector.load %arg7[%c0_22, %c0_23] : memref<8x72xbf16, #tpu.memory_space<vmem>>, vector<8x72xbf16>
    %cst_24 = arith.constant dense<0.000000e+00> : vector<8x512xf32>
    %93 = tpu.matmul %92, %91, %cst_24 {dimension_numbers = #tpu.dot_dimension_numbers<[1], [0], [0], [1], [0, 0, 1, 1], [], []>} : vector<8x72xbf16>, vector<72x512xbf16>, vector<8x512xf32> -> vector<8x512xf32>
    %c0_25 = arith.constant 0 : index
    %c0_26 = arith.constant 0 : index
    %94 = vector.load %arg8[%c0_25, %c0_26] : memref<8x8xbf16, #tpu.memory_space<vmem>>, vector<8x8xbf16>
    %95 = arith.truncf %4 : vector<8x512xf32> to vector<8x512xbf16>
    %cst_27 = arith.constant dense<0.000000e+00> : vector<8x512xf32>
    %96 = tpu.matmul %94, %95, %cst_27 {dimension_numbers = #tpu.dot_dimension_numbers<[1], [0], [0], [1], [0, 0, 1, 1], [], []>} : vector<8x8xbf16>, vector<8x512xbf16>, vector<8x512xf32> -> vector<8x512xf32>
    %97 = arith.addf %96, %93 : vector<8x512xf32>
    %98 = arith.truncf %97 : vector<8x512xf32> to vector<8x512xbf16>
    %cst_28 = arith.constant dense<0.000000e+00> : vector<8x128xf32>
    %99 = tpu.matmul %98, %2, %cst_28 {dimension_numbers = #tpu.dot_dimension_numbers<[1], [0], [0], [1], [0, 0, 1, 1], [], []>} : vector<8x512xbf16>, vector<512x128xbf16>, vector<8x128xf32> -> vector<8x128xf32>
    %c0_29 = arith.constant 0 : index
    %c0_30 = arith.constant 0 : index
    %100 = vector.load %arg9[%c0_29, %c0_30] : memref<32x1xf32, #tpu.memory_space<vmem>>, vector<32x1xf32>
    %101 = vector.extract_strided_slice %100 {offsets = [0, 0], sizes = [8, 1], strides = [1, 1]} : vector<32x1xf32> to vector<8x1xf32>
    %102 = vector.extract_strided_slice %100 {offsets = [8, 0], sizes = [8, 1], strides = [1, 1]} : vector<32x1xf32> to vector<8x1xf32>
    %103 = vector.extract_strided_slice %100 {offsets = [16, 0], sizes = [8, 1], strides = [1, 1]} : vector<32x1xf32> to vector<8x1xf32>
    %104 = vector.extract_strided_slice %100 {offsets = [24, 0], sizes = [8, 1], strides = [1, 1]} : vector<32x1xf32> to vector<8x1xf32>
    %105 = vector.broadcast %101 : vector<8x1xf32> to vector<8x128xf32>
    %106 = arith.mulf %99, %105 : vector<8x128xf32>
    %107 = vector.broadcast %102 : vector<8x1xf32> to vector<8x128xf32>
    %108 = arith.addf %106, %107 : vector<8x128xf32>
    %cst_31 = arith.constant 0.000000e+00 : f32
    %109 = vector.broadcast %cst_31 : f32 to vector<8x128xf32>
    %110 = arith.maximumf %108, %109 : vector<8x128xf32>
    %c9_i32 = arith.constant 9 : i32
    %111 = tpu.dynamic_rotate %110 by %c9_i32 dim 1 : vector<8x128xf32>, i32 -> vector<8x128xf32>
    %112 = vector.extract_strided_slice %1 {offsets = [0, 0], sizes = [1, 128], strides = [1, 1]} : vector<8x128xf32> to vector<1x128xf32>
    %113 = vector.broadcast %112 : vector<1x128xf32> to vector<8x128xf32>
    %114 = arith.mulf %111, %113 : vector<8x128xf32>
    %c8_i32 = arith.constant 8 : i32
    %115 = tpu.dynamic_rotate %110 by %c8_i32 dim 1 : vector<8x128xf32>, i32 -> vector<8x128xf32>
    %116 = vector.extract_strided_slice %1 {offsets = [1, 0], sizes = [1, 128], strides = [1, 1]} : vector<8x128xf32> to vector<1x128xf32>
    %117 = vector.broadcast %116 : vector<1x128xf32> to vector<8x128xf32>
    %118 = arith.mulf %115, %117 : vector<8x128xf32>
    %c7_i32 = arith.constant 7 : i32
    %119 = tpu.dynamic_rotate %110 by %c7_i32 dim 1 : vector<8x128xf32>, i32 -> vector<8x128xf32>
    %120 = vector.extract_strided_slice %1 {offsets = [2, 0], sizes = [1, 128], strides = [1, 1]} : vector<8x128xf32> to vector<1x128xf32>
    %121 = vector.broadcast %120 : vector<1x128xf32> to vector<8x128xf32>
    %122 = arith.mulf %119, %121 : vector<8x128xf32>
    %c1_i32_32 = arith.constant 1 : i32
    %123 = tpu.dynamic_rotate %110 by %c1_i32_32 dim 1 : vector<8x128xf32>, i32 -> vector<8x128xf32>
    %124 = vector.extract_strided_slice %1 {offsets = [3, 0], sizes = [1, 128], strides = [1, 1]} : vector<8x128xf32> to vector<1x128xf32>
    %125 = vector.broadcast %124 : vector<1x128xf32> to vector<8x128xf32>
    %126 = arith.mulf %123, %125 : vector<8x128xf32>
    %c127_i32 = arith.constant 127 : i32
    %127 = tpu.dynamic_rotate %110 by %c127_i32 dim 1 : vector<8x128xf32>, i32 -> vector<8x128xf32>
    %128 = vector.extract_strided_slice %1 {offsets = [4, 0], sizes = [1, 128], strides = [1, 1]} : vector<8x128xf32> to vector<1x128xf32>
    %129 = vector.broadcast %128 : vector<1x128xf32> to vector<8x128xf32>
    %130 = arith.mulf %127, %129 : vector<8x128xf32>
    %c121_i32 = arith.constant 121 : i32
    %131 = tpu.dynamic_rotate %110 by %c121_i32 dim 1 : vector<8x128xf32>, i32 -> vector<8x128xf32>
    %132 = vector.extract_strided_slice %1 {offsets = [5, 0], sizes = [1, 128], strides = [1, 1]} : vector<8x128xf32> to vector<1x128xf32>
    %133 = vector.broadcast %132 : vector<1x128xf32> to vector<8x128xf32>
    %134 = arith.mulf %131, %133 : vector<8x128xf32>
    %c120_i32 = arith.constant 120 : i32
    %135 = tpu.dynamic_rotate %110 by %c120_i32 dim 1 : vector<8x128xf32>, i32 -> vector<8x128xf32>
    %136 = vector.extract_strided_slice %1 {offsets = [6, 0], sizes = [1, 128], strides = [1, 1]} : vector<8x128xf32> to vector<1x128xf32>
    %137 = vector.broadcast %136 : vector<1x128xf32> to vector<8x128xf32>
    %138 = arith.mulf %135, %137 : vector<8x128xf32>
    %c119_i32 = arith.constant 119 : i32
    %139 = tpu.dynamic_rotate %110 by %c119_i32 dim 1 : vector<8x128xf32>, i32 -> vector<8x128xf32>
    %140 = vector.extract_strided_slice %1 {offsets = [7, 0], sizes = [1, 128], strides = [1, 1]} : vector<8x128xf32> to vector<1x128xf32>
    %141 = vector.broadcast %140 : vector<1x128xf32> to vector<8x128xf32>
    %142 = arith.mulf %139, %141 : vector<8x128xf32>
    %143 = tpu.concatenate %114, %118, %122, %126, %110, %130, %134, %138, %142 in 0 : vector<8x128xf32>, vector<8x128xf32>, vector<8x128xf32>, vector<8x128xf32>, vector<8x128xf32>, vector<8x128xf32>, vector<8x128xf32>, vector<8x128xf32>, vector<8x128xf32> -> vector<72x128xf32>
    %144 = arith.truncf %143 : vector<72x128xf32> to vector<72x128xbf16>
    %c0_33 = arith.constant 0 : index
    %c0_34 = arith.constant 0 : index
    %145 = vector.load %arg10[%c0_33, %c0_34] : memref<8x72xbf16, #tpu.memory_space<vmem>>, vector<8x72xbf16>
    %cst_35 = arith.constant dense<0.000000e+00> : vector<8x128xf32>
    %146 = tpu.matmul %145, %144, %cst_35 {dimension_numbers = #tpu.dot_dimension_numbers<[1], [0], [0], [1], [0, 0, 1, 1], [], []>} : vector<8x72xbf16>, vector<72x128xbf16>, vector<8x128xf32> -> vector<8x128xf32>
    %147 = vector.broadcast %103 : vector<8x1xf32> to vector<8x128xf32>
    %148 = arith.mulf %146, %147 : vector<8x128xf32>
    %149 = vector.broadcast %104 : vector<8x1xf32> to vector<8x128xf32>
    %150 = arith.addf %148, %149 : vector<8x128xf32>
    %cst_36 = arith.constant 0.000000e+00 : f32
    %151 = vector.broadcast %cst_36 : f32 to vector<8x128xf32>
    %152 = arith.maximumf %150, %151 : vector<8x128xf32>
    %c9_i32_37 = arith.constant 9 : i32
    %153 = tpu.dynamic_rotate %152 by %c9_i32_37 dim 1 : vector<8x128xf32>, i32 -> vector<8x128xf32>
    %154 = vector.extract_strided_slice %1 {offsets = [0, 0], sizes = [1, 128], strides = [1, 1]} : vector<8x128xf32> to vector<1x128xf32>
    %155 = vector.broadcast %154 : vector<1x128xf32> to vector<8x128xf32>
    %156 = arith.mulf %153, %155 : vector<8x128xf32>
    %c8_i32_38 = arith.constant 8 : i32
    %157 = tpu.dynamic_rotate %152 by %c8_i32_38 dim 1 : vector<8x128xf32>, i32 -> vector<8x128xf32>
    %158 = vector.extract_strided_slice %1 {offsets = [1, 0], sizes = [1, 128], strides = [1, 1]} : vector<8x128xf32> to vector<1x128xf32>
    %159 = vector.broadcast %158 : vector<1x128xf32> to vector<8x128xf32>
    %160 = arith.mulf %157, %159 : vector<8x128xf32>
    %c7_i32_39 = arith.constant 7 : i32
    %161 = tpu.dynamic_rotate %152 by %c7_i32_39 dim 1 : vector<8x128xf32>, i32 -> vector<8x128xf32>
    %162 = vector.extract_strided_slice %1 {offsets = [2, 0], sizes = [1, 128], strides = [1, 1]} : vector<8x128xf32> to vector<1x128xf32>
    %163 = vector.broadcast %162 : vector<1x128xf32> to vector<8x128xf32>
    %164 = arith.mulf %161, %163 : vector<8x128xf32>
    %c1_i32_40 = arith.constant 1 : i32
    %165 = tpu.dynamic_rotate %152 by %c1_i32_40 dim 1 : vector<8x128xf32>, i32 -> vector<8x128xf32>
    %166 = vector.extract_strided_slice %1 {offsets = [3, 0], sizes = [1, 128], strides = [1, 1]} : vector<8x128xf32> to vector<1x128xf32>
    %167 = vector.broadcast %166 : vector<1x128xf32> to vector<8x128xf32>
    %168 = arith.mulf %165, %167 : vector<8x128xf32>
    %c127_i32_41 = arith.constant 127 : i32
    %169 = tpu.dynamic_rotate %152 by %c127_i32_41 dim 1 : vector<8x128xf32>, i32 -> vector<8x128xf32>
    %170 = vector.extract_strided_slice %1 {offsets = [4, 0], sizes = [1, 128], strides = [1, 1]} : vector<8x128xf32> to vector<1x128xf32>
    %171 = vector.broadcast %170 : vector<1x128xf32> to vector<8x128xf32>
    %172 = arith.mulf %169, %171 : vector<8x128xf32>
    %c121_i32_42 = arith.constant 121 : i32
    %173 = tpu.dynamic_rotate %152 by %c121_i32_42 dim 1 : vector<8x128xf32>, i32 -> vector<8x128xf32>
    %174 = vector.extract_strided_slice %1 {offsets = [5, 0], sizes = [1, 128], strides = [1, 1]} : vector<8x128xf32> to vector<1x128xf32>
    %175 = vector.broadcast %174 : vector<1x128xf32> to vector<8x128xf32>
    %176 = arith.mulf %173, %175 : vector<8x128xf32>
    %c120_i32_43 = arith.constant 120 : i32
    %177 = tpu.dynamic_rotate %152 by %c120_i32_43 dim 1 : vector<8x128xf32>, i32 -> vector<8x128xf32>
    %178 = vector.extract_strided_slice %1 {offsets = [6, 0], sizes = [1, 128], strides = [1, 1]} : vector<8x128xf32> to vector<1x128xf32>
    %179 = vector.broadcast %178 : vector<1x128xf32> to vector<8x128xf32>
    %180 = arith.mulf %177, %179 : vector<8x128xf32>
    %c119_i32_44 = arith.constant 119 : i32
    %181 = tpu.dynamic_rotate %152 by %c119_i32_44 dim 1 : vector<8x128xf32>, i32 -> vector<8x128xf32>
    %182 = vector.extract_strided_slice %1 {offsets = [7, 0], sizes = [1, 128], strides = [1, 1]} : vector<8x128xf32> to vector<1x128xf32>
    %183 = vector.broadcast %182 : vector<1x128xf32> to vector<8x128xf32>
    %184 = arith.mulf %181, %183 : vector<8x128xf32>
    %185 = tpu.concatenate %156, %160, %164, %168, %152, %172, %176, %180, %184 in 0 : vector<8x128xf32>, vector<8x128xf32>, vector<8x128xf32>, vector<8x128xf32>, vector<8x128xf32>, vector<8x128xf32>, vector<8x128xf32>, vector<8x128xf32>, vector<8x128xf32> -> vector<72x128xf32>
    %186 = arith.truncf %185 : vector<72x128xf32> to vector<72x128xbf16>
    %c0_45 = arith.constant 0 : index
    %c0_46 = arith.constant 0 : index
    %187 = vector.load %arg11[%c0_45, %c0_46] : memref<8x72xbf16, #tpu.memory_space<vmem>>, vector<8x72xbf16>
    %cst_47 = arith.constant dense<0.000000e+00> : vector<8x128xf32>
    %188 = tpu.matmul %187, %186, %cst_47 {dimension_numbers = #tpu.dot_dimension_numbers<[1], [0], [0], [1], [0, 0, 1, 1], [], []>} : vector<8x72xbf16>, vector<72x128xbf16>, vector<8x128xf32> -> vector<8x128xf32>
    %189 = arith.addf %99, %188 : vector<8x128xf32>
    %c0_48 = arith.constant 0 : index
    %c0_49 = arith.constant 0 : index
    %c0_50 = arith.constant 0 : index
    %190 = vector.load %arg12[%c0_48, %c0_49, %c0_50] : memref<1x8x128xf32, #tpu.memory_space<vmem>>, vector<1x8x128xf32>
    %191 = vector.shape_cast %190 : vector<1x8x128xf32> to vector<8x128xf32>
    %192 = vector.shape_cast %189 : vector<8x128xf32> to vector<1x8x128xf32>
    tpu.vector_store %arg12[%c0_48, %c0_49, %c0_50], %192 {strides = array<i32>} : memref<1x8x128xf32, #tpu.memory_space<vmem>>, vector<1x8x128xf32>,
    return
  }
  func.func @transform_0(%arg0: i32) -> (i32, i32, i32) {
    %c0_i32 = arith.constant 0 : i32
    %c0_i32_0 = arith.constant 0 : i32
    %c0_i32_1 = arith.constant 0 : i32
    return %arg0, %c0_i32, %c0_i32_0 : i32, i32, i32
  }
  func.func @transform_1(%arg0: i32) -> (i32, i32) {
    %c0_i32 = arith.constant 0 : i32
    %c0_i32_0 = arith.constant 0 : i32
    %c0_i32_1 = arith.constant 0 : i32
    return %c0_i32, %c0_i32_0 : i32, i32
  }
  func.func @transform_2(%arg0: i32) -> (i32, i32) {
    %c0_i32 = arith.constant 0 : i32
    %c0_i32_0 = arith.constant 0 : i32
    %c0_i32_1 = arith.constant 0 : i32
    return %c0_i32, %c0_i32_0 : i32, i32
  }
  func.func @transform_3(%arg0: i32) -> (i32, i32) {
    %c0_i32 = arith.constant 0 : i32
    %c0_i32_0 = arith.constant 0 : i32
    %c0_i32_1 = arith.constant 0 : i32
    return %c0_i32, %c0_i32_0 : i32, i32
  }
  func.func @transform_4(%arg0: i32) -> (i32, i32) {
    %c0_i32 = arith.constant 0 : i32
    %c0_i32_0 = arith.constant 0 : i32
    %c0_i32_1 = arith.constant 0 : i32
    return %c0_i32, %c0_i32_0 : i32, i32
  }
  func.func @transform_5(%arg0: i32) -> (i32, i32) {
    %c0_i32 = arith.constant 0 : i32
    %c0_i32_0 = arith.constant 0 : i32
    %c0_i32_1 = arith.constant 0 : i32
    return %c0_i32, %c0_i32_0 : i32, i32
  }
  func.func @transform_6(%arg0: i32) -> (i32, i32) {
    %c0_i32 = arith.constant 0 : i32
    %c0_i32_0 = arith.constant 0 : i32
    %c0_i32_1 = arith.constant 0 : i32
    return %c0_i32, %c0_i32_0 : i32, i32
  }
  func.func @transform_7(%arg0: i32) -> (i32, i32) {
    %c0_i32 = arith.constant 0 : i32
    %c0_i32_0 = arith.constant 0 : i32
    %c0_i32_1 = arith.constant 0 : i32
    return %c0_i32, %c0_i32_0 : i32, i32
  }
  func.func @transform_8(%arg0: i32) -> (i32, i32) {
    %c0_i32 = arith.constant 0 : i32
    %c0_i32_0 = arith.constant 0 : i32
    %c0_i32_1 = arith.constant 0 : i32
    return %c0_i32, %c0_i32_0 : i32, i32
  }
  func.func @transform_9(%arg0: i32) -> (i32, i32) {
    %c0_i32 = arith.constant 0 : i32
    %c0_i32_0 = arith.constant 0 : i32
    %c0_i32_1 = arith.constant 0 : i32
    return %c0_i32, %c0_i32_0 : i32, i32
  }
  func.func @transform_10(%arg0: i32) -> (i32, i32) {
    %c0_i32 = arith.constant 0 : i32
    %c0_i32_0 = arith.constant 0 : i32
    %c0_i32_1 = arith.constant 0 : i32
    return %c0_i32, %c0_i32_0 : i32, i32
  }
  func.func @transform_11(%arg0: i32) -> (i32, i32, i32) {
    %c0_i32 = arith.constant 0 : i32
    %c0_i32_0 = arith.constant 0 : i32
    %c0_i32_1 = arith.constant 0 : i32
    return %arg0, %c0_i32, %c0_i32_0 : i32, i32, i32
  }
}

</mosaic_0001>

<llo_original>
// kernel: tile.19
$region0: #{tile.19}
  %s0 = inlined_call_operand.vmem [shape: f32[8,2,64], index: 0, kind: input, shape index: {}]
  %s1 = inlined_call_operand.vmem [shape: f32[8,128], index: 1, kind: output, shape index: {}]
  $region1: #{tile.19} parent=0
    #allocation0 [shape = 'u8[32768]{0}', space=vmem, size = 0x8000, scoped, tag = 'scoped mem for input reshape']
    %s3 = sshllo.u32 0, 2
    %s4 = smul.addr 2, 7
    %s5 = scalar_lea.vmem %s0, %s4
    %v6 = vld [vmem:[%s5] sm:%s3]
    %s7 = scalar_lea.vmem [#allocation0], 56
    %8 = vst [vmem:[%s7] sm:%s3] %v6
    %s9 = smul.addr 2, 6
    %s10 = scalar_lea.vmem %s0, %s9
    %v11 = vld [vmem:[%s10] sm:%s3]
    %s12 = scalar_lea.vmem [#allocation0], 48
    %13 = vst [vmem:[%s12] sm:%s3] %v11
    %s14 = smul.addr 2, 5
    %s15 = scalar_lea.vmem %s0, %s14
    %v16 = vld [vmem:[%s15] sm:%s3]
    %s17 = scalar_lea.vmem [#allocation0], 40
    %18 = vst [vmem:[%s17] sm:%s3] %v16
    %s19 = smul.addr 2, 4
    %s20 = scalar_lea.vmem %s0, %s19
    %v21 = vld [vmem:[%s20] sm:%s3]
    %s22 = scalar_lea.vmem [#allocation0], 32
    %23 = vst [vmem:[%s22] sm:%s3] %v21
    %s24 = smul.addr 2, 3
    %s25 = scalar_lea.vmem %s0, %s24
    %v26 = vld [vmem:[%s25] sm:%s3]
    %s27 = scalar_lea.vmem [#allocation0], 24
    %28 = vst [vmem:[%s27] sm:%s3] %v26
    %s29 = smul.addr 2, 2
    %s30 = scalar_lea.vmem %s0, %s29
    %v31 = vld [vmem:[%s30] sm:%s3]
    %s32 = scalar_lea.vmem [#allocation0], 16
    %33 = vst [vmem:[%s32] sm:%s3] %v31
    %s34 = scalar_lea.vmem %s0, 2
    %v35 = vld [vmem:[%s34] sm:%s3]
    %s36 = scalar_lea.vmem [#allocation0], 8
    %37 = vst [vmem:[%s36] sm:%s3] %v35
    %v38 = vld [vmem:[%s0] sm:%s3]
    %39 = vst [vmem:[#allocation0] sm:%s3] %v38
    %v40 = vld [vmem:[#allocation0] ss:$8 sm:$0xf]
    %v41 = vld [vmem:[#allocation0] ss:$8 sm:$0xf0]
    %vm42 = vcmask 1047556
    %v43 = vsel %vm42, %v41, %v40
    %vm44 = vcmask 523264
    %45 = vst.msk [vmem:[%s1] sm:$0xff] %vm44, %v43
    %s46 = scalar_lea.vmem [#allocation0], 1
    %v47 = vld [vmem:[%s46] ss:$8 sm:$0xf]
    %s48 = scalar_lea.vmem [#allocation0], 1
    %v49 = vld [vmem:[%s48] ss:$8 sm:$0xf0]
    %vm50 = vcmask 1047556
    %v51 = vsel %vm50, %v49, %v47
    %52 = vrot.lane.b32.xlu0 %v51, 64
    %v53 = vpop.permute.xlu0 %52
    %vm54 = vcmask 1048064
    %55 = vst.msk [vmem:[%s1] sm:$0xff] %vm54, %v53

// kernel: resnet_group_forward.1
$region0: #{resnet_group_forward.1}
  #allocation0 [shape = 'u32[]', space=smem, size = 0x4, offset = 0x4, fixed_abs, tag = 'smem constant byte address 0x4 - core index']
  #allocation1 [shape = 'u32[144,128]{1,0:T(1,128)}', space=vmem, size = 0x12000, scoped, tag = 'internal scratch']
  %s0 = inlined_call_operand.vmem [shape: f32[1,8,512], index: 0, kind: input, shape index: {}]
  %s1 = inlined_call_operand.vmem [shape: f32[8,512], index: 1, kind: input, shape index: {}]
  %s2 = inlined_call_operand.vmem [shape: f32[8,128], index: 2, kind: input, shape index: {}]
  %s3 = inlined_call_operand.vmem [shape: bf16[512,128], index: 3, kind: input, shape index: {}]
  %s4 = inlined_call_operand.vmem [shape: f32[32,1], index: 4, kind: input, shape index: {}]
  %s5 = inlined_call_operand.vmem [shape: bf16[8,72], index: 5, kind: input, shape index: {}]
  %s6 = inlined_call_operand.vmem [shape: bf16[8,72], index: 6, kind: input, shape index: {}]
  %s7 = inlined_call_operand.vmem [shape: bf16[8,8], index: 7, kind: input, shape index: {}]
  %s8 = inlined_call_operand.vmem [shape: f32[32,1], index: 8, kind: input, shape index: {}]
  %s9 = inlined_call_operand.vmem [shape: bf16[8,72], index: 9, kind: input, shape index: {}]
  %s10 = inlined_call_operand.vmem [shape: bf16[8,72], index: 10, kind: input, shape index: {}]
  %s11 = inlined_call_operand.vmem [shape: f32[1,8,128], index: 11, kind: output, shape index: {}]
  %s12 = sld [smem:[#allocation0]]
  $region54: #{resnet_group_forward.1} parent=0
    _
  %s14 = ssub.s32 1, %s12
  %s15 = scalar_select 0, %s14, %s12
  // Predicated region
  $region2: #{resnet_group_forward.1} parent=0 // pred_check
    _
  $region3: #{resnet_group_forward.1} parent=0 // pred_check_branch
    %17 = sbr.rel (0) target = $region5
  $region4: #{resnet_group_forward.1} parent=0 // pred_region
    _
  $region5: #{resnet_group_forward.1} parent=0 // pred_fallthru
    _
  // Predicated region
  $region6: #{resnet_group_forward.1} parent=0 // pred_check
    _
  $region7: #{resnet_group_forward.1} parent=0 // pred_check_branch
    %19 = sbr.rel (0) target = $region9
  $region8: #{resnet_group_forward.1} parent=0 // pred_region
    _
  $region9: #{resnet_group_forward.1} parent=0 // pred_fallthru
    _
  // Predicated region
  $region10: #{resnet_group_forward.1} parent=0 // pred_check
    _
  $region11: #{resnet_group_forward.1} parent=0 // pred_check_branch
    %21 = sbr.rel (0) target = $region13
  $region12: #{resnet_group_forward.1} parent=0 // pred_region
    _
  $region13: #{resnet_group_forward.1} parent=0 // pred_fallthru
    _
  // Predicated region
  $region14: #{resnet_group_forward.1} parent=0 // pred_check
    _
  $region15: #{resnet_group_forward.1} parent=0 // pred_check_branch
    %23 = sbr.rel (0) target = $region17
  $region16: #{resnet_group_forward.1} parent=0 // pred_region
    _
  $region17: #{resnet_group_forward.1} parent=0 // pred_fallthru
    _
  // Predicated region
  $region18: #{resnet_group_forward.1} parent=0 // pred_check
    _
  $region19: #{resnet_group_forward.1} parent=0 // pred_check_branch
    %25 = sbr.rel (0) target = $region21
  $region20: #{resnet_group_forward.1} parent=0 // pred_region
    _
  $region21: #{resnet_group_forward.1} parent=0 // pred_fallthru
    _
  // Predicated region
  $region22: #{resnet_group_forward.1} parent=0 // pred_check
    _
  $region23: #{resnet_group_forward.1} parent=0 // pred_check_branch
    %27 = sbr.rel (0) target = $region25
  $region24: #{resnet_group_forward.1} parent=0 // pred_region
    _
  $region25: #{resnet_group_forward.1} parent=0 // pred_fallthru
    _
  // Predicated region
  $region26: #{resnet_group_forward.1} parent=0 // pred_check
    _
  $region27: #{resnet_group_forward.1} parent=0 // pred_check_branch
    %29 = sbr.rel (0) target = $region29
  $region28: #{resnet_group_forward.1} parent=0 // pred_region
    _
  $region29: #{resnet_group_forward.1} parent=0 // pred_fallthru
    _
  // Predicated region
  $region30: #{resnet_group_forward.1} parent=0 // pred_check
    _
  $region31: #{resnet_group_forward.1} parent=0 // pred_check_branch
    %31 = sbr.rel (0) target = $region33
  $region32: #{resnet_group_forward.1} parent=0 // pred_region
    _
  $region33: #{resnet_group_forward.1} parent=0 // pred_fallthru
    _
  // Predicated region
  $region34: #{resnet_group_forward.1} parent=0 // pred_check
    _
  $region35: #{resnet_group_forward.1} parent=0 // pred_check_branch
    %33 = sbr.rel (0) target = $region37
  $region36: #{resnet_group_forward.1} parent=0 // pred_region
    _
  $region37: #{resnet_group_forward.1} parent=0 // pred_fallthru
    _
  // Predicated region
  $region38: #{resnet_group_forward.1} parent=0 // pred_check
    _
  $region39: #{resnet_group_forward.1} parent=0 // pred_check_branch
    %35 = sbr.rel (0) target = $region41
  $region40: #{resnet_group_forward.1} parent=0 // pred_region
    _
  $region41: #{resnet_group_forward.1} parent=0 // pred_fallthru
    _
  // Predicated region
  $region42: #{resnet_group_forward.1} parent=0 // pred_check
    _
  $region43: #{resnet_group_forward.1} parent=0 // pred_check_branch
    %37 = sbr.rel (0) target = $region45
  $region44: #{resnet_group_forward.1} parent=0 // pred_region
    _
  $region45: #{resnet_group_forward.1} parent=0 // pred_fallthru
    _
  %v39 = vld [vmem:[%s1] sm:$0xff]
  %v40 = vld [vmem:[%s1 + $0x8] sm:$0xff]
  %v41 = vld [vmem:[%s1 + $0x10] sm:$0xff]
  %v42 = vld [vmem:[%s1 + $0x18] sm:$0xff]
  %v43 = vld [vmem:[%s2] sm:$0xff]
  %v44 = vld [vmem:[%s3] sm:$0xf]
  %v45 = vld [vmem:[%s3 + $0x4] sm:$0xf]
  %v46 = vld [vmem:[%s3 + $0x8] sm:$0xf]
  %v47 = vld [vmem:[%s3 + $0xc] sm:$0xf]
  %v48 = vld [vmem:[%s3 + $0x10] sm:$0xf]
  %v49 = vld [vmem:[%s3 + $0x14] sm:$0xf]
  %v50 = vld [vmem:[%s3 + $0x18] sm:$0xf]
  %v51 = vld [vmem:[%s3 + $0x1c] sm:$0xf]
  %v52 = vld [vmem:[%s3 + $0x20] sm:$0xf]
  %v53 = vld [vmem:[%s3 + $0x24] sm:$0xf]
  %v54 = vld [vmem:[%s3 + $0x28] sm:$0xf]
  %v55 = vld [vmem:[%s3 + $0x2c] sm:$0xf]
  %v56 = vld [vmem:[%s3 + $0x30] sm:$0xf]
  %v57 = vld [vmem:[%s3 + $0x34] sm:$0xf]
  %v58 = vld [vmem:[%s3 + $0x38] sm:$0xf]
  %v59 = vld [vmem:[%s3 + $0x3c] sm:$0xf]
  %v60 = vld [vmem:[%s3 + $0x40] sm:$0xf]
  %v61 = vld [vmem:[%s3 + $0x44] sm:$0xf]
  %v62 = vld [vmem:[%s3 + $0x48] sm:$0xf]
  %v63 = vld [vmem:[%s3 + $0x4c] sm:$0xf]
  %v64 = vld [vmem:[%s3 + $0x50] sm:$0xf]
  %v65 = vld [vmem:[%s3 + $0x54] sm:$0xf]
  %v66 = vld [vmem:[%s3 + $0x58] sm:$0xf]
  %v67 = vld [vmem:[%s3 + $0x5c] sm:$0xf]
  %v68 = vld [vmem:[%s3 + $0x60] sm:$0xf]
  %v69 = vld [vmem:[%s3 + $0x64] sm:$0xf]
  %v70 = vld [vmem:[%s3 + $0x68] sm:$0xf]
  %v71 = vld [vmem:[%s3 + $0x6c] sm:$0xf]
  %v72 = vld [vmem:[%s3 + $0x70] sm:$0xf]
  %v73 = vld [vmem:[%s3 + $0x74] sm:$0xf]
  %v74 = vld [vmem:[%s3 + $0x78] sm:$0xf]
  %v75 = vld [vmem:[%s3 + $0x7c] sm:$0xf]
  %v76 = vld [vmem:[%s3 + $0x80] sm:$0xf]
  %v77 = vld [vmem:[%s3 + $0x84] sm:$0xf]
  %v78 = vld [vmem:[%s3 + $0x88] sm:$0xf]
  %v79 = vld [vmem:[%s3 + $0x8c] sm:$0xf]
  %v80 = vld [vmem:[%s3 + $0x90] sm:$0xf]
  %v81 = vld [vmem:[%s3 + $0x94] sm:$0xf]
  %v82 = vld [vmem:[%s3 + $0x98] sm:$0xf]
  %v83 = vld [vmem:[%s3 + $0x9c] sm:$0xf]
  %v84 = vld [vmem:[%s3 + $0xa0] sm:$0xf]
  %v85 = vld [vmem:[%s3 + $0xa4] sm:$0xf]
  %v86 = vld [vmem:[%s3 + $0xa8] sm:$0xf]
  %v87 = vld [vmem:[%s3 + $0xac] sm:$0xf]
  %v88 = vld [vmem:[%s3 + $0xb0] sm:$0xf]
  %v89 = vld [vmem:[%s3 + $0xb4] sm:$0xf]
  %v90 = vld [vmem:[%s3 + $0xb8] sm:$0xf]
  %v91 = vld [vmem:[%s3 + $0xbc] sm:$0xf]
  %v92 = vld [vmem:[%s3 + $0xc0] sm:$0xf]
  %v93 = vld [vmem:[%s3 + $0xc4] sm:$0xf]
  %v94 = vld [vmem:[%s3 + $0xc8] sm:$0xf]
  %v95 = vld [vmem:[%s3 + $0xcc] sm:$0xf]
  %v96 = vld [vmem:[%s3 + $0xd0] sm:$0xf]
  %v97 = vld [vmem:[%s3 + $0xd4] sm:$0xf]
  %v98 = vld [vmem:[%s3 + $0xd8] sm:$0xf]
  %v99 = vld [vmem:[%s3 + $0xdc] sm:$0xf]
  %v100 = vld [vmem:[%s3 + $0xe0] sm:$0xf]
  %v101 = vld [vmem:[%s3 + $0xe4] sm:$0xf]
  %v102 = vld [vmem:[%s3 + $0xe8] sm:$0xf]
  %v103 = vld [vmem:[%s3 + $0xec] sm:$0xf]
  %v104 = vld [vmem:[%s3 + $0xf0] sm:$0xf]
  %v105 = vld [vmem:[%s3 + $0xf4] sm:$0xf]
  %v106 = vld [vmem:[%s3 + $0xf8] sm:$0xf]
  %v107 = vld [vmem:[%s3 + $0xfc] sm:$0xf]
  %v108 = vld [vmem:[%s0] sm:$0xff]
  %v109 = vld [vmem:[%s0 + $0x8] sm:$0xff]
  %v110 = vld [vmem:[%s0 + $0x10] sm:$0xff]
  %v111 = vld [vmem:[%s0 + $0x18] sm:$0xff]
  %v112 = vld [vmem:[%s4] sm:$0xff]
  %v113 = vld [vmem:[%s4 + $0x8] sm:$0xff]
  %v114 = vld [vmem:[%s4 + $0x10] sm:$0xff]
  %v115 = vld [vmem:[%s4 + $0x18] sm:$0xff]
  %117 = vset.pattern.permute.xlu0 0
  %118 = vperm.xlu0 %117, %v112
  %v119 = vpop.permute.xlu0 %118
  %v121 = vmul.f32 %v108, %v119
  %v122 = vmul.f32 %v109, %v119
  %v123 = vmul.f32 %v110, %v119
  %v124 = vmul.f32 %v111, %v119
  %126 = vset.pattern.permute.xlu0 0
  %127 = vperm.xlu0 %126, %v113
  %v128 = vpop.permute.xlu0 %127
  %v130 = vadd.f32 %v121, %v128
  %v131 = vadd.f32 %v122, %v128
  %v132 = vadd.f32 %v123, %v128
  %v133 = vadd.f32 %v124, %v128
  %v134 = vmax.f32 %v130, 0.0
  %v135 = vmax.f32 %v131, 0.0
  %v136 = vmax.f32 %v132, 0.0
  %v137 = vmax.f32 %v133, 0.0
  %138 = vrot.lane.b32.xlu0 %v134, 17
  %v139 = vpop.permute.xlu0 %138
  %140 = vrot.lane.b32.xlu0 %v135, 17
  %v141 = vpop.permute.xlu0 %140
  %142 = vrot.lane.b32.xlu0 %v136, 17
  %v143 = vpop.permute.xlu0 %142
  %144 = vrot.lane.b32.xlu0 %v137, 17
  %v145 = vpop.permute.xlu0 %144
  %v146 = vlaneseq
  %v147 = vand.u32 %v146, 127
  %vm148 = vcmp.lt.s32.totalorder %v147, 17
  %v149 = vsel %vm148, %v143, %v145
  %v150 = vsel %vm148, %v141, %v143
  %v151 = vsel %vm148, %v139, %v141
  %v152 = vsel %vm148, %v145, %v139
  %v153 = vlaneseq
  %v154 = vshrl.u32 %v153, 7
  %v155 = vsub.s32 0, %v154
  %v156 = vrot.slane %v39, %v155
  %v157 = vlaneseq
  %v158 = vshrl.u32 %v157, 7
  %v159 = vsub.s32 0, %v158
  %v160 = vrot.slane %v40, %v159
  %v161 = vlaneseq
  %v162 = vshrl.u32 %v161, 7
  %v163 = vsub.s32 0, %v162
  %v164 = vrot.slane %v41, %v163
  %v165 = vlaneseq
  %v166 = vshrl.u32 %v165, 7
  %v167 = vsub.s32 0, %v166
  %v168 = vrot.slane %v42, %v167
  %v169 = vmul.f32 %v152, %v156
  %v170 = vmul.f32 %v151, %v160
  %v171 = vmul.f32 %v150, %v164
  %v172 = vmul.f32 %v149, %v168
  %173 = vrot.lane.b32.xlu0 %v134, 16
  %v174 = vpop.permute.xlu0 %173
  %175 = vrot.lane.b32.xlu0 %v135, 16
  %v176 = vpop.permute.xlu0 %175
  %177 = vrot.lane.b32.xlu0 %v136, 16
  %v178 = vpop.permute.xlu0 %177
  %179 = vrot.lane.b32.xlu0 %v137, 16
  %v180 = vpop.permute.xlu0 %179
  %vm181 = vcmp.lt.s32.totalorder %v147, 16
  %v182 = vsel %vm181, %v178, %v180
  %v183 = vsel %vm181, %v176, %v178
  %v184 = vsel %vm181, %v174, %v176
  %v185 = vsel %vm181, %v180, %v174
  %v186 = vlaneseq
  %v187 = vshrl.u32 %v186, 7
  %v188 = vsub.s32 1, %v187
  %v189 = vrot.slane %v39, %v188
  %v190 = vlaneseq
  %v191 = vshrl.u32 %v190, 7
  %v192 = vsub.s32 1, %v191
  %v193 = vrot.slane %v40, %v192
  %v194 = vlaneseq
  %v195 = vshrl.u32 %v194, 7
  %v196 = vsub.s32 1, %v195
  %v197 = vrot.slane %v41, %v196
  %v198 = vlaneseq
  %v199 = vshrl.u32 %v198, 7
  %v200 = vsub.s32 1, %v199
  %v201 = vrot.slane %v42, %v200
  %v202 = vmul.f32 %v185, %v189
  %v203 = vmul.f32 %v184, %v193
  %v204 = vmul.f32 %v183, %v197
  %v205 = vmul.f32 %v182, %v201
  %206 = vrot.lane.b32.xlu0 %v134, 15
  %v207 = vpop.permute.xlu0 %206
  %208 = vrot.lane.b32.xlu0 %v135, 15
  %v209 = vpop.permute.xlu0 %208
  %210 = vrot.lane.b32.xlu0 %v136, 15
  %v211 = vpop.permute.xlu0 %210
  %212 = vrot.lane.b32.xlu0 %v137, 15
  %v213 = vpop.permute.xlu0 %212
  %vm214 = vcmp.lt.s32.totalorder %v147, 15
  %v215 = vsel %vm214, %v211, %v213
  %v216 = vsel %vm214, %v209, %v211
  %v217 = vsel %vm214, %v207, %v209
  %v218 = vsel %vm214, %v213, %v207
  %v219 = vlaneseq
  %v220 = vshrl.u32 %v219, 7
  %v221 = vsub.s32 2, %v220
  %v222 = vrot.slane %v39, %v221
  %v223 = vlaneseq
  %v224 = vshrl.u32 %v223, 7
  %v225 = vsub.s32 2, %v224
  %v226 = vrot.slane %v40, %v225
  %v227 = vlaneseq
  %v228 = vshrl.u32 %v227, 7
  %v229 = vsub.s32 2, %v228
  %v230 = vrot.slane %v41, %v229
  %v231 = vlaneseq
  %v232 = vshrl.u32 %v231, 7
  %v233 = vsub.s32 2, %v232
  %v234 = vrot.slane %v42, %v233
  %v235 = vmul.f32 %v218, %v222
  %v236 = vmul.f32 %v217, %v226
  %v237 = vmul.f32 %v216, %v230
  %v238 = vmul.f32 %v215, %v234
  %239 = vrot.lane.b32.xlu0 %v134, 1
  %v240 = vpop.permute.xlu0 %239
  %241 = vrot.lane.b32.xlu0 %v135, 1
  %v242 = vpop.permute.xlu0 %241
  %243 = vrot.lane.b32.xlu0 %v136, 1
  %v244 = vpop.permute.xlu0 %243
  %245 = vrot.lane.b32.xlu0 %v137, 1
  %v246 = vpop.permute.xlu0 %245
  %vm247 = vcmp.lt.s32.totalorder %v147, 1
  %v248 = vsel %vm247, %v244, %v246
  %v249 = vsel %vm247, %v242, %v244
  %v250 = vsel %vm247, %v240, %v242
  %v251 = vsel %vm247, %v246, %v240
  %v252 = vlaneseq
  %v253 = vshrl.u32 %v252, 7
  %v254 = vsub.s32 3, %v253
  %v255 = vrot.slane %v39, %v254
  %v256 = vlaneseq
  %v257 = vshrl.u32 %v256, 7
  %v258 = vsub.s32 3, %v257
  %v259 = vrot.slane %v40, %v258
  %v260 = vlaneseq
  %v261 = vshrl.u32 %v260, 7
  %v262 = vsub.s32 3, %v261
  %v263 = vrot.slane %v41, %v262
  %v264 = vlaneseq
  %v265 = vshrl.u32 %v264, 7
  %v266 = vsub.s32 3, %v265
  %v267 = vrot.slane %v42, %v266
  %v268 = vmul.f32 %v251, %v255
  %v269 = vmul.f32 %v250, %v259
  %v270 = vmul.f32 %v249, %v263
  %v271 = vmul.f32 %v248, %v267
  %272 = vrot.lane.b32.xlu0 %v134, 127
  %v273 = vpop.permute.xlu0 %272
  %274 = vrot.lane.b32.xlu0 %v135, 127
  %v275 = vpop.permute.xlu0 %274
  %276 = vrot.lane.b32.xlu0 %v136, 127
  %v277 = vpop.permute.xlu0 %276
  %278 = vrot.lane.b32.xlu0 %v137, 127
  %v279 = vpop.permute.xlu0 %278
  %vm280 = vcmp.lt.s32.totalorder %v147, 127
  %v281 = vsel %vm280, %v277, %v279
  %v282 = vsel %vm280, %v275, %v277
  %v283 = vsel %vm280, %v273, %v275
  %v284 = vsel %vm280, %v279, %v273
  %v285 = vlaneseq
  %v286 = vshrl.u32 %v285, 7
  %v287 = vsub.s32 4, %v286
  %v288 = vrot.slane %v39, %v287
  %v289 = vlaneseq
  %v290 = vshrl.u32 %v289, 7
  %v291 = vsub.s32 4, %v290
  %v292 = vrot.slane %v40, %v291
  %v293 = vlaneseq
  %v294 = vshrl.u32 %v293, 7
  %v295 = vsub.s32 4, %v294
  %v296 = vrot.slane %v41, %v295
  %v297 = vlaneseq
  %v298 = vshrl.u32 %v297, 7
  %v299 = vsub.s32 4, %v298
  %v300 = vrot.slane %v42, %v299
  %v301 = vmul.f32 %v283, %v288
  %v302 = vmul.f32 %v282, %v292
  %v303 = vmul.f32 %v281, %v296
  %v304 = vmul.f32 %v284, %v300
  %305 = vrot.lane.b32.xlu0 %v134, 113
  %v306 = vpop.permute.xlu0 %305
  %307 = vrot.lane.b32.xlu0 %v135, 113
  %v308 = vpop.permute.xlu0 %307
  %309 = vrot.lane.b32.xlu0 %v136, 113
  %v310 = vpop.permute.xlu0 %309
  %311 = vrot.lane.b32.xlu0 %v137, 113
  %v312 = vpop.permute.xlu0 %311
  %vm313 = vcmp.lt.s32.totalorder %v147, 113
  %v314 = vsel %vm313, %v310, %v312
  %v315 = vsel %vm313, %v308, %v310
  %v316 = vsel %vm313, %v306, %v308
  %v317 = vsel %vm313, %v312, %v306
  %v318 = vlaneseq
  %v319 = vshrl.u32 %v318, 7
  %v320 = vsub.s32 5, %v319
  %v321 = vrot.slane %v39, %v320
  %v322 = vlaneseq
  %v323 = vshrl.u32 %v322, 7
  %v324 = vsub.s32 5, %v323
  %v325 = vrot.slane %v40, %v324
  %v326 = vlaneseq
  %v327 = vshrl.u32 %v326, 7
  %v328 = vsub.s32 5, %v327
  %v329 = vrot.slane %v41, %v328
  %v330 = vlaneseq
  %v331 = vshrl.u32 %v330, 7
  %v332 = vsub.s32 5, %v331
  %v333 = vrot.slane %v42, %v332
  %v334 = vmul.f32 %v316, %v321
  %v335 = vmul.f32 %v315, %v325
  %v336 = vmul.f32 %v314, %v329
  %v337 = vmul.f32 %v317, %v333
  %338 = vrot.lane.b32.xlu0 %v134, 112
  %v339 = vpop.permute.xlu0 %338
  %340 = vrot.lane.b32.xlu0 %v135, 112
  %v341 = vpop.permute.xlu0 %340
  %342 = vrot.lane.b32.xlu0 %v136, 112
  %v343 = vpop.permute.xlu0 %342
  %344 = vrot.lane.b32.xlu0 %v137, 112
  %v345 = vpop.permute.xlu0 %344
  %vm346 = vcmp.lt.s32.totalorder %v147, 112
  %v347 = vsel %vm346, %v343, %v345
  %v348 = vsel %vm346, %v341, %v343
  %v349 = vsel %vm346, %v339, %v341
  %v350 = vsel %vm346, %v345, %v339
  %v351 = vlaneseq
  %v352 = vshrl.u32 %v351, 7
  %v353 = vsub.s32 6, %v352
  %v354 = vrot.slane %v39, %v353
  %v355 = vlaneseq
  %v356 = vshrl.u32 %v355, 7
  %v357 = vsub.s32 6, %v356
  %v358 = vrot.slane %v40, %v357
  %v359 = vlaneseq
  %v360 = vshrl.u32 %v359, 7
  %v361 = vsub.s32 6, %v360
  %v362 = vrot.slane %v41, %v361
  %v363 = vlaneseq
  %v364 = vshrl.u32 %v363, 7
  %v365 = vsub.s32 6, %v364
  %v366 = vrot.slane %v42, %v365
  %v367 = vmul.f32 %v349, %v354
  %v368 = vmul.f32 %v348, %v358
  %v369 = vmul.f32 %v347, %v362
  %v370 = vmul.f32 %v350, %v366
  %371 = vrot.lane.b32.xlu0 %v134, 111
  %v372 = vpop.permute.xlu0 %371
  %373 = vrot.lane.b32.xlu0 %v135, 111
  %v374 = vpop.permute.xlu0 %373
  %375 = vrot.lane.b32.xlu0 %v136, 111
  %v376 = vpop.permute.xlu0 %375
  %377 = vrot.lane.b32.xlu0 %v137, 111
  %v378 = vpop.permute.xlu0 %377
  %vm379 = vcmp.lt.s32.totalorder %v147, 111
  %v380 = vsel %vm379, %v376, %v378
  %v381 = vsel %vm379, %v374, %v376
  %v382 = vsel %vm379, %v372, %v374
  %v383 = vsel %vm379, %v378, %v372
  %v384 = vlaneseq
  %v385 = vshrl.u32 %v384, 7
  %v386 = vsub.s32 7, %v385
  %v387 = vrot.slane %v39, %v386
  %v388 = vlaneseq
  %v389 = vshrl.u32 %v388, 7
  %v390 = vsub.s32 7, %v389
  %v391 = vrot.slane %v40, %v390
  %v392 = vlaneseq
  %v393 = vshrl.u32 %v392, 7
  %v394 = vsub.s32 7, %v393
  %v395 = vrot.slane %v41, %v394
  %v396 = vlaneseq
  %v397 = vshrl.u32 %v396, 7
  %v398 = vsub.s32 7, %v397
  %v399 = vrot.slane %v42, %v398
  %v400 = vmul.f32 %v382, %v387
  %v401 = vmul.f32 %v381, %v391
  %v402 = vmul.f32 %v380, %v395
  %v403 = vmul.f32 %v383, %v399
  %v404 = vpack.c.bf16 %v202, %v169
  %v405 = vpack.c.bf16 %v203, %v170
  %v406 = vpack.c.bf16 %v204, %v171
  %v407 = vpack.c.bf16 %v205, %v172
  %v408 = vpack.c.bf16 %v268, %v235
  %v409 = vpack.c.bf16 %v269, %v236
  %v410 = vpack.c.bf16 %v270, %v237
  %v411 = vpack.c.bf16 %v271, %v238
  %v412 = vpack.c.bf16 %v301, %v134
  %v413 = vpack.c.bf16 %v302, %v135
  %v414 = vpack.c.bf16 %v303, %v136
  %v415 = vpack.c.bf16 %v304, %v137
  %v416 = vpack.c.bf16 %v367, %v334
  %v417 = vpack.c.bf16 %v368, %v335
  %v418 = vpack.c.bf16 %v369, %v336
  %v419 = vpack.c.bf16 %v370, %v337
  %v420 = vpack.c.bf16 %v400, %v400
  %v421 = vpack.c.bf16 %v401, %v401
  %v422 = vpack.c.bf16 %v402, %v402
  %v423 = vpack.c.bf16 %v403, %v403
  %v424 = vld [vmem:[%s5] sm:$0xf]
  %vm425 = vcmask 588800
  %v427 = vsel %vm425, %v424, 0
  %vm429 = vcmask 1043456
  %v431 = vsel %vm429, %v420, 0
  %v434 = vsel %vm429, %v421, 0
  %v437 = vsel %vm429, %v422, 0
  %v440 = vsel %vm429, %v423, 0
  %442 = vmatprep.subr.bf16.mxu0 %v405
  %443 = vmatpush1.bf16.msra.mxu0 %v404
  %444 = vmatprep.subr.bf16.mxu0 %v409
  %445 = vmatpush1.bf16.msra.mxu0 %v408
  %446 = vmatprep.subr.bf16.mxu0 %v413
  %447 = vmatpush1.bf16.msra.mxu0 %v412
  %448 = vmatprep.subr.bf16.mxu0 %v417
  %449 = vmatpush1.bf16.msra.mxu0 %v416
  %450 = vmatprep.subr.bf16.mxu0 %v434
  %451 = vmatpush1.bf16.msra.mxu0 %v431
  %452 = vmatprep.subr.bf16.mxu0 0
  %453 = vmatpush1.bf16.msra.mxu0 0
  %454 = vmatprep.subr.bf16.mxu0 0
  %455 = vmatpush1.bf16.msra.mxu0 0
  %456 = vmatprep.subr.bf16.mxu0 0
  %457 = vmatpush1.bf16.msra.mxu0 0
  %458 = vmatprep.subr.bf16.mxu0 0
  %459 = vmatpush1.bf16.msra.mxu0 0
  %460 = vmatprep.subr.bf16.mxu0 0
  %461 = vmatpush1.bf16.msra.mxu0 0
  %462 = vmatprep.subr.bf16.mxu0 0
  %463 = vmatpush1.bf16.msra.mxu0 0
  %464 = vmatprep.subr.bf16.mxu0 0
  %465 = vmatpush1.bf16.msra.mxu0 0
  %466 = vmatprep.subr.bf16.mxu0 0
  %467 = vmatpush1.bf16.msra.mxu0 0
  %468 = vmatprep.subr.bf16.mxu0 0
  %469 = vmatpush1.bf16.msra.mxu0 0
  %470 = vmatprep.subr.bf16.mxu0 0
  %471 = vmatpush1.bf16.msra.mxu0 0
  %472 = vmatprep.subr.bf16.mxu0 0
  %473 = vmatpush1.bf16.msra.mxu0 0
  %474 = vmatprep.mubr.bf16.mxu0 0
  %475 = vmatmul.mubr.bf16.gmra.mrb[0].mxu0 %v427
  %v476 = vpop.f32.mrb[0].mxu0
  %v477 = vadd.f32 0.0, %v476
  %v478 = vpop.f32.mrb[0].mxu0
  %v479 = vadd.f32 0.0, %v478
  %v480 = vpop.f32.mrb[0].mxu0
  %v481 = vpop.f32.mrb[0].mxu0
  %482 = vdwg.mxu0
  %483 = vmatprep.subr.bf16.mxu0 %v407
  %484 = vmatpush1.bf16.msra.mxu0 %v406
  %485 = vmatprep.subr.bf16.mxu0 %v411
  %486 = vmatpush1.bf16.msra.mxu0 %v410
  %487 = vmatprep.subr.bf16.mxu0 %v415
  %488 = vmatpush1.bf16.msra.mxu0 %v414
  %489 = vmatprep.subr.bf16.mxu0 %v419
  %490 = vmatpush1.bf16.msra.mxu0 %v418
  %491 = vmatprep.subr.bf16.mxu0 %v440
  %492 = vmatpush1.bf16.msra.mxu0 %v437
  %493 = vmatprep.subr.bf16.mxu0 0
  %494 = vmatpush1.bf16.msra.mxu0 0
  %495 = vmatprep.subr.bf16.mxu0 0
  %496 = vmatpush1.bf16.msra.mxu0 0
  %497 = vmatprep.subr.bf16.mxu0 0
  %498 = vmatpush1.bf16.msra.mxu0 0
  %499 = vmatprep.subr.bf16.mxu0 0
  %500 = vmatpush1.bf16.msra.mxu0 0
  %501 = vmatprep.subr.bf16.mxu0 0
  %502 = vmatpush1.bf16.msra.mxu0 0
  %503 = vmatprep.subr.bf16.mxu0 0
  %504 = vmatpush1.bf16.msra.mxu0 0
  %505 = vmatprep.subr.bf16.mxu0 0
  %506 = vmatpush1.bf16.msra.mxu0 0
  %507 = vmatprep.subr.bf16.mxu0 0
  %508 = vmatpush1.bf16.msra.mxu0 0
  %509 = vmatprep.subr.bf16.mxu0 0
  %510 = vmatpush1.bf16.msra.mxu0 0
  %511 = vmatprep.subr.bf16.mxu0 0
  %512 = vmatpush1.bf16.msra.mxu0 0
  %513 = vmatprep.subr.bf16.mxu0 0
  %514 = vmatpush1.bf16.msra.mxu0 0
  %515 = vmatprep.mubr.bf16.mxu0 0
  %516 = vmatmul.mubr.bf16.gmra.mrb[0].mxu0 %v427
  %v517 = vpop.f32.mrb[0].mxu0
  %v518 = vadd.f32 0.0, %v517
  %v519 = vpop.f32.mrb[0].mxu0
  %v520 = vadd.f32 0.0, %v519
  %v521 = vpop.f32.mrb[0].mxu0
  %v522 = vpop.f32.mrb[0].mxu0
  %523 = vdwg.mxu0
  %525 = vset.pattern.permute.xlu0 0
  %526 = vperm.xlu0 %525, %v114
  %v527 = vpop.permute.xlu0 %526
  %v529 = vmul.f32 %v477, %v527
  %v530 = vmul.f32 %v479, %v527
  %v531 = vmul.f32 %v518, %v527
  %v532 = vmul.f32 %v520, %v527
  %534 = vset.pattern.permute.xlu0 0
  %535 = vperm.xlu0 %534, %v115
  %v536 = vpop.permute.xlu0 %535
  %v538 = vadd.f32 %v529, %v536
  %v539 = vadd.f32 %v530, %v536
  %v540 = vadd.f32 %v531, %v536
  %v541 = vadd.f32 %v532, %v536
  %v542 = vmax.f32 %v538, 0.0
  %v543 = vmax.f32 %v539, 0.0
  %v544 = vmax.f32 %v540, 0.0
  %v545 = vmax.f32 %v541, 0.0
  %546 = vrot.lane.b32.xlu0 %v542, 17
  %v547 = vpop.permute.xlu0 %546
  %548 = vrot.lane.b32.xlu0 %v543, 17
  %v549 = vpop.permute.xlu0 %548
  %550 = vrot.lane.b32.xlu0 %v544, 17
  %v551 = vpop.permute.xlu0 %550
  %552 = vrot.lane.b32.xlu0 %v545, 17
  %v553 = vpop.permute.xlu0 %552
  %v554 = vsel %vm148, %v551, %v553
  %v555 = vsel %vm148, %v549, %v551
  %v556 = vsel %vm148, %v547, %v549
  %v557 = vsel %vm148, %v553, %v547
  %v558 = vmul.f32 %v557, %v156
  %v559 = vmul.f32 %v556, %v160
  %v560 = vmul.f32 %v555, %v164
  %v561 = vmul.f32 %v554, %v168
  %562 = vrot.lane.b32.xlu0 %v542, 16
  %v563 = vpop.permute.xlu0 %562
  %564 = vrot.lane.b32.xlu0 %v543, 16
  %v565 = vpop.permute.xlu0 %564
  %566 = vrot.lane.b32.xlu0 %v544, 16
  %v567 = vpop.permute.xlu0 %566
  %568 = vrot.lane.b32.xlu0 %v545, 16
  %v569 = vpop.permute.xlu0 %568
  %v570 = vsel %vm181, %v567, %v569
  %v571 = vsel %vm181, %v565, %v567
  %v572 = vsel %vm181, %v563, %v565
  %v573 = vsel %vm181, %v569, %v563
  %v574 = vmul.f32 %v573, %v189
  %v575 = vmul.f32 %v572, %v193
  %v576 = vmul.f32 %v571, %v197
  %v577 = vmul.f32 %v570, %v201
  %578 = vrot.lane.b32.xlu0 %v542, 15
  %v579 = vpop.permute.xlu0 %578
  %580 = vrot.lane.b32.xlu0 %v543, 15
  %v581 = vpop.permute.xlu0 %580
  %582 = vrot.lane.b32.xlu0 %v544, 15
  %v583 = vpop.permute.xlu0 %582
  %584 = vrot.lane.b32.xlu0 %v545, 15
  %v585 = vpop.permute.xlu0 %584
  %v586 = vsel %vm214, %v583, %v585
  %v587 = vsel %vm214, %v581, %v583
  %v588 = vsel %vm214, %v579, %v581
  %v589 = vsel %vm214, %v585, %v579
  %v590 = vmul.f32 %v589, %v222
  %v591 = vmul.f32 %v588, %v226
  %v592 = vmul.f32 %v587, %v230
  %v593 = vmul.f32 %v586, %v234
  %594 = vrot.lane.b32.xlu0 %v542, 1
  %v595 = vpop.permute.xlu0 %594
  %596 = vrot.lane.b32.xlu0 %v543, 1
  %v597 = vpop.permute.xlu0 %596
  %598 = vrot.lane.b32.xlu0 %v544, 1
  %v599 = vpop.permute.xlu0 %598
  %600 = vrot.lane.b32.xlu0 %v545, 1
  %v601 = vpop.permute.xlu0 %600
  %v602 = vsel %vm247, %v599, %v601
  %v603 = vsel %vm247, %v597, %v599
  %v604 = vsel %vm247, %v595, %v597
  %v605 = vsel %vm247, %v601, %v595
  %v606 = vmul.f32 %v605, %v255
  %v607 = vmul.f32 %v604, %v259
  %v608 = vmul.f32 %v603, %v263
  %v609 = vmul.f32 %v602, %v267
  %610 = vrot.lane.b32.xlu0 %v542, 127
  %v611 = vpop.permute.xlu0 %610
  %612 = vrot.lane.b32.xlu0 %v543, 127
  %v613 = vpop.permute.xlu0 %612
  %614 = vrot.lane.b32.xlu0 %v544, 127
  %v615 = vpop.permute.xlu0 %614
  %616 = vrot.lane.b32.xlu0 %v545, 127
  %v617 = vpop.permute.xlu0 %616
  %v618 = vsel %vm280, %v615, %v617
  %v619 = vsel %vm280, %v613, %v615
  %v620 = vsel %vm280, %v611, %v613
  %v621 = vsel %vm280, %v617, %v611
  %v622 = vmul.f32 %v620, %v288
  %v623 = vmul.f32 %v619, %v292
  %v624 = vmul.f32 %v618, %v296
  %v625 = vmul.f32 %v621, %v300
  %626 = vrot.lane.b32.xlu0 %v542, 113
  %v627 = vpop.permute.xlu0 %626
  %628 = vrot.lane.b32.xlu0 %v543, 113
  %v629 = vpop.permute.xlu0 %628
  %630 = vrot.lane.b32.xlu0 %v544, 113
  %v631 = vpop.permute.xlu0 %630
  %632 = vrot.lane.b32.xlu0 %v545, 113
  %v633 = vpop.permute.xlu0 %632
  %v634 = vsel %vm313, %v631, %v633
  %v635 = vsel %vm313, %v629, %v631
  %v636 = vsel %vm313, %v627, %v629
  %v637 = vsel %vm313, %v633, %v627
  %v638 = vmul.f32 %v636, %v321
  %v639 = vmul.f32 %v635, %v325
  %v640 = vmul.f32 %v634, %v329
  %v641 = vmul.f32 %v637, %v333
  %642 = vrot.lane.b32.xlu0 %v542, 112
  %v643 = vpop.permute.xlu0 %642
  %644 = vrot.lane.b32.xlu0 %v543, 112
  %v645 = vpop.permute.xlu0 %644
  %646 = vrot.lane.b32.xlu0 %v544, 112
  %v647 = vpop.permute.xlu0 %646
  %648 = vrot.lane.b32.xlu0 %v545, 112
  %v649 = vpop.permute.xlu0 %648
  %v650 = vsel %vm346, %v647, %v649
  %v651 = vsel %vm346, %v645, %v647
  %v652 = vsel %vm346, %v643, %v645
  %v653 = vsel %vm346, %v649, %v643
  %v654 = vmul.f32 %v652, %v354
  %v655 = vmul.f32 %v651, %v358
  %v656 = vmul.f32 %v650, %v362
  %v657 = vmul.f32 %v653, %v366
  %658 = vrot.lane.b32.xlu0 %v542, 111
  %v659 = vpop.permute.xlu0 %658
  %660 = vrot.lane.b32.xlu0 %v543, 111
  %v661 = vpop.permute.xlu0 %660
  %662 = vrot.lane.b32.xlu0 %v544, 111
  %v663 = vpop.permute.xlu0 %662
  %664 = vrot.lane.b32.xlu0 %v545, 111
  %v665 = vpop.permute.xlu0 %664
  %v666 = vsel %vm379, %v663, %v665
  %v667 = vsel %vm379, %v661, %v663
  %v668 = vsel %vm379, %v659, %v661
  %v669 = vsel %vm379, %v665, %v659
  %v670 = vmul.f32 %v668, %v387
  %v671 = vmul.f32 %v667, %v391
  %v672 = vmul.f32 %v666, %v395
  %v673 = vmul.f32 %v669, %v399
  %v674 = vpack.c.bf16 %v574, %v558
  %v675 = vpack.c.bf16 %v575, %v559
  %v676 = vpack.c.bf16 %v576, %v560
  %v677 = vpack.c.bf16 %v577, %v561
  %v678 = vpack.c.bf16 %v606, %v590
  %v679 = vpack.c.bf16 %v607, %v591
  %v680 = vpack.c.bf16 %v608, %v592
  %v681 = vpack.c.bf16 %v609, %v593
  %v682 = vpack.c.bf16 %v622, %v542
  %v683 = vpack.c.bf16 %v623, %v543
  %v684 = vpack.c.bf16 %v624, %v544
  %v685 = vpack.c.bf16 %v625, %v545
  %v686 = vpack.c.bf16 %v654, %v638
  %v687 = vpack.c.bf16 %v655, %v639
  %v688 = vpack.c.bf16 %v656, %v640
  %v689 = vpack.c.bf16 %v657, %v641
  %v690 = vpack.c.bf16 %v670, %v670
  %v691 = vpack.c.bf16 %v671, %v671
  %v692 = vpack.c.bf16 %v672, %v672
  %v693 = vpack.c.bf16 %v673, %v673
  %v694 = vld [vmem:[%s6] sm:$0xf]
  %v696 = vsel %vm425, %v694, 0
  %v699 = vsel %vm429, %v690, 0
  %v702 = vsel %vm429, %v691, 0
  %v705 = vsel %vm429, %v692, 0
  %v708 = vsel %vm429, %v693, 0
  %710 = vmatprep.subr.bf16.mxu0 %v675
  %711 = vmatpush1.bf16.msra.mxu0 %v674
  %712 = vmatprep.subr.bf16.mxu0 %v679
  %713 = vmatpush1.bf16.msra.mxu0 %v678
  %714 = vmatprep.subr.bf16.mxu0 %v683
  %715 = vmatpush1.bf16.msra.mxu0 %v682
  %716 = vmatprep.subr.bf16.mxu0 %v687
  %717 = vmatpush1.bf16.msra.mxu0 %v686
  %718 = vmatprep.subr.bf16.mxu0 %v702
  %719 = vmatpush1.bf16.msra.mxu0 %v699
  %720 = vmatprep.subr.bf16.mxu0 0
  %721 = vmatpush1.bf16.msra.mxu0 0
  %722 = vmatprep.subr.bf16.mxu0 0
  %723 = vmatpush1.bf16.msra.mxu0 0
  %724 = vmatprep.subr.bf16.mxu0 0
  %725 = vmatpush1.bf16.msra.mxu0 0
  %726 = vmatprep.subr.bf16.mxu0 0
  %727 = vmatpush1.bf16.msra.mxu0 0
  %728 = vmatprep.subr.bf16.mxu0 0
  %729 = vmatpush1.bf16.msra.mxu0 0
  %730 = vmatprep.subr.bf16.mxu0 0
  %731 = vmatpush1.bf16.msra.mxu0 0
  %732 = vmatprep.subr.bf16.mxu0 0
  %733 = vmatpush1.bf16.msra.mxu0 0
  %734 = vmatprep.subr.bf16.mxu0 0
  %735 = vmatpush1.bf16.msra.mxu0 0
  %736 = vmatprep.subr.bf16.mxu0 0
  %737 = vmatpush1.bf16.msra.mxu0 0
  %738 = vmatprep.subr.bf16.mxu0 0
  %739 = vmatpush1.bf16.msra.mxu0 0
  %740 = vmatprep.subr.bf16.mxu0 0
  %741 = vmatpush1.bf16.msra.mxu0 0
  %742 = vmatprep.mubr.bf16.mxu0 0
  %743 = vmatmul.mubr.bf16.gmra.mrb[0].mxu0 %v696
  %v744 = vpop.f32.mrb[0].mxu0
  %v745 = vadd.f32 0.0, %v744
  %v746 = vpop.f32.mrb[0].mxu0
  %v747 = vadd.f32 0.0, %v746
  %v748 = vpop.f32.mrb[0].mxu0
  %v749 = vpop.f32.mrb[0].mxu0
  %750 = vdwg.mxu0
  %751 = vmatprep.subr.bf16.mxu0 %v677
  %752 = vmatpush1.bf16.msra.mxu0 %v676
  %753 = vmatprep.subr.bf16.mxu0 %v681
  %754 = vmatpush1.bf16.msra.mxu0 %v680
  %755 = vmatprep.subr.bf16.mxu0 %v685
  %756 = vmatpush1.bf16.msra.mxu0 %v684
  %757 = vmatprep.subr.bf16.mxu0 %v689
  %758 = vmatpush1.bf16.msra.mxu0 %v688
  %759 = vmatprep.subr.bf16.mxu0 %v708
  %760 = vmatpush1.bf16.msra.mxu0 %v705
  %761 = vmatprep.subr.bf16.mxu0 0
  %762 = vmatpush1.bf16.msra.mxu0 0
  %763 = vmatprep.subr.bf16.mxu0 0
  %764 = vmatpush1.bf16.msra.mxu0 0
  %765 = vmatprep.subr.bf16.mxu0 0
  %766 = vmatpush1.bf16.msra.mxu0 0
  %767 = vmatprep.subr.bf16.mxu0 0
  %768 = vmatpush1.bf16.msra.mxu0 0
  %769 = vmatprep.subr.bf16.mxu0 0
  %770 = vmatpush1.bf16.msra.mxu0 0
  %771 = vmatprep.subr.bf16.mxu0 0
  %772 = vmatpush1.bf16.msra.mxu0 0
  %773 = vmatprep.subr.bf16.mxu0 0
  %774 = vmatpush1.bf16.msra.mxu0 0
  %775 = vmatprep.subr.bf16.mxu0 0
  %776 = vmatpush1.bf16.msra.mxu0 0
  %777 = vmatprep.subr.bf16.mxu0 0
  %778 = vmatpush1.bf16.msra.mxu0 0
  %779 = vmatprep.subr.bf16.mxu0 0
  %780 = vmatpush1.bf16.msra.mxu0 0
  %781 = vmatprep.subr.bf16.mxu0 0
  %782 = vmatpush1.bf16.msra.mxu0 0
  %783 = vmatprep.mubr.bf16.mxu0 0
  %784 = vmatmul.mubr.bf16.gmra.mrb[0].mxu0 %v696
  %v785 = vpop.f32.mrb[0].mxu0
  %v786 = vadd.f32 0.0, %v785
  %v787 = vpop.f32.mrb[0].mxu0
  %v788 = vadd.f32 0.0, %v787
  %v789 = vpop.f32.mrb[0].mxu0
  %v790 = vpop.f32.mrb[0].mxu0
  %791 = vdwg.mxu0
  %v792 = vld [vmem:[%s7] sm:$0xf]
  %v793 = vpack.c.bf16 %v108, %v108
  %v794 = vpack.c.bf16 %v109, %v109
  %v795 = vpack.c.bf16 %v110, %v110
  %v796 = vpack.c.bf16 %v111, %v111
  %vm797 = vcmask 64512
  %v799 = vsel %vm797, %v792, 0
  %v802 = vsel %vm429, %v793, 0
  %v805 = vsel %vm429, %v794, 0
  %v808 = vsel %vm429, %v795, 0
  %v811 = vsel %vm429, %v796, 0
  %813 = vmatprep.subr.bf16.mxu0 %v805
  %814 = vmatpush1.bf16.msra.mxu0 %v802
  %815 = vmatprep.subr.bf16.mxu0 0
  %816 = vmatpush1.bf16.msra.mxu0 0
  %817 = vmatprep.subr.bf16.mxu0 0
  %818 = vmatpush1.bf16.msra.mxu0 0
  %819 = vmatprep.subr.bf16.mxu0 0
  %820 = vmatpush1.bf16.msra.mxu0 0
  %821 = vmatprep.subr.bf16.mxu0 0
  %822 = vmatpush1.bf16.msra.mxu0 0
  %823 = vmatprep.subr.bf16.mxu0 0
  %824 = vmatpush1.bf16.msra.mxu0 0
  %825 = vmatprep.subr.bf16.mxu0 0
  %826 = vmatpush1.bf16.msra.mxu0 0
  %827 = vmatprep.subr.bf16.mxu0 0
  %828 = vmatpush1.bf16.msra.mxu0 0
  %829 = vmatprep.subr.bf16.mxu0 0
  %830 = vmatpush1.bf16.msra.mxu0 0
  %831 = vmatprep.subr.bf16.mxu0 0
  %832 = vmatpush1.bf16.msra.mxu0 0
  %833 = vmatprep.subr.bf16.mxu0 0
  %834 = vmatpush1.bf16.msra.mxu0 0
  %835 = vmatprep.subr.bf16.mxu0 0
  %836 = vmatpush1.bf16.msra.mxu0 0
  %837 = vmatprep.subr.bf16.mxu0 0
  %838 = vmatpush1.bf16.msra.mxu0 0
  %839 = vmatprep.subr.bf16.mxu0 0
  %840 = vmatpush1.bf16.msra.mxu0 0
  %841 = vmatprep.subr.bf16.mxu0 0
  %842 = vmatpush1.bf16.msra.mxu0 0
  %843 = vmatprep.subr.bf16.mxu0 0
  %844 = vmatpush1.bf16.msra.mxu0 0
  %845 = vmatprep.mubr.bf16.mxu0 0
  %846 = vmatmul.mubr.bf16.gmra.mrb[0].mxu0 %v799
  %v847 = vpop.f32.mrb[0].mxu0
  %v848 = vadd.f32 %v745, %v847
  %v849 = vpop.f32.mrb[0].mxu0
  %v850 = vadd.f32 %v747, %v849
  %v851 = vpop.f32.mrb[0].mxu0
  %v852 = vpop.f32.mrb[0].mxu0
  %853 = vdwg.mxu0
  %854 = vmatprep.subr.bf16.mxu0 %v811
  %855 = vmatpush1.bf16.msra.mxu0 %v808
  %856 = vmatprep.subr.bf16.mxu0 0
  %857 = vmatpush1.bf16.msra.mxu0 0
  %858 = vmatprep.subr.bf16.mxu0 0
  %859 = vmatpush1.bf16.msra.mxu0 0
  %860 = vmatprep.subr.bf16.mxu0 0
  %861 = vmatpush1.bf16.msra.mxu0 0
  %862 = vmatprep.subr.bf16.mxu0 0
  %863 = vmatpush1.bf16.msra.mxu0 0
  %864 = vmatprep.subr.bf16.mxu0 0
  %865 = vmatpush1.bf16.msra.mxu0 0
  %866 = vmatprep.subr.bf16.mxu0 0
  %867 = vmatpush1.bf16.msra.mxu0 0
  %868 = vmatprep.subr.bf16.mxu0 0
  %869 = vmatpush1.bf16.msra.mxu0 0
  %870 = vmatprep.subr.bf16.mxu0 0
  %871 = vmatpush1.bf16.msra.mxu0 0
  %872 = vmatprep.subr.bf16.mxu0 0
  %873 = vmatpush1.bf16.msra.mxu0 0
  %874 = vmatprep.subr.bf16.mxu0 0
  %875 = vmatpush1.bf16.msra.mxu0 0
  %876 = vmatprep.subr.bf16.mxu0 0
  %877 = vmatpush1.bf16.msra.mxu0 0
  %878 = vmatprep.subr.bf16.mxu0 0
  %879 = vmatpush1.bf16.msra.mxu0 0
  %880 = vmatprep.subr.bf16.mxu0 0
  %881 = vmatpush1.bf16.msra.mxu0 0
  %882 = vmatprep.subr.bf16.mxu0 0
  %883 = vmatpush1.bf16.msra.mxu0 0
  %884 = vmatprep.subr.bf16.mxu0 0
  %885 = vmatpush1.bf16.msra.mxu0 0
  %886 = vmatprep.mubr.bf16.mxu0 0
  %887 = vmatmul.mubr.bf16.gmra.mrb[0].mxu0 %v799
  %v888 = vpop.f32.mrb[0].mxu0
  %v889 = vadd.f32 %v786, %v888
  %v890 = vpop.f32.mrb[0].mxu0
  %v891 = vadd.f32 %v788, %v890
  %v892 = vpop.f32.mrb[0].mxu0
  %v893 = vpop.f32.mrb[0].mxu0
  %894 = vdwg.mxu0
  %v895 = vpack.c.bf16 %v848, %v848
  %v896 = vpack.c.bf16 %v850, %v850
  %v897 = vpack.c.bf16 %v889, %v889
  %v898 = vpack.c.bf16 %v891, %v891
  %v963 = vunpack.c.l.b16 %v44
  %v964 = vunpack.c.l.b16 %v45
  %v965 = vunpack.c.l.b16 %v46
  %v966 = vunpack.c.l.b16 %v47
  %v967 = vunpack.c.l.b16 %v48
  %v968 = vunpack.c.l.b16 %v49
  %v969 = vunpack.c.l.b16 %v50
  %v970 = vunpack.c.l.b16 %v51
  %v971 = vunpack.c.l.b16 %v52
  %v972 = vunpack.c.l.b16 %v53
  %v973 = vunpack.c.l.b16 %v54
  %v974 = vunpack.c.l.b16 %v55
  %v975 = vunpack.c.l.b16 %v56
  %v976 = vunpack.c.l.b16 %v57
  %v977 = vunpack.c.l.b16 %v58
  %v978 = vunpack.c.l.b16 %v59
  %v979 = vunpack.c.l.b16 %v60
  %v980 = vunpack.c.l.b16 %v61
  %v981 = vunpack.c.l.b16 %v62
  %v982 = vunpack.c.l.b16 %v63
  %v983 = vunpack.c.l.b16 %v64
  %v984 = vunpack.c.l.b16 %v65
  %v985 = vunpack.c.l.b16 %v66
  %v986 = vunpack.c.l.b16 %v67
  %v987 = vunpack.c.l.b16 %v68
  %v988 = vunpack.c.l.b16 %v69
  %v989 = vunpack.c.l.b16 %v70
  %v990 = vunpack.c.l.b16 %v71
  %v991 = vunpack.c.l.b16 %v72
  %v992 = vunpack.c.l.b16 %v73
  %v993 = vunpack.c.l.b16 %v74
  %v994 = vunpack.c.l.b16 %v75
  %v995 = vunpack.c.l.b16 %v76
  %v996 = vunpack.c.l.b16 %v77
  %v997 = vunpack.c.l.b16 %v78
  %v998 = vunpack.c.l.b16 %v79
  %v999 = vunpack.c.l.b16 %v80
  %v1000 = vunpack.c.l.b16 %v81
  %v1001 = vunpack.c.l.b16 %v82
  %v1002 = vunpack.c.l.b16 %v83
  %v1003 = vunpack.c.l.b16 %v84
  %v1004 = vunpack.c.l.b16 %v85
  %v1005 = vunpack.c.l.b16 %v86
  %v1006 = vunpack.c.l.b16 %v87
  %v1007 = vunpack.c.l.b16 %v88
  %v1008 = vunpack.c.l.b16 %v89
  %v1009 = vunpack.c.l.b16 %v90
  %v1010 = vunpack.c.l.b16 %v91
  %v1011 = vunpack.c.l.b16 %v92
  %v1012 = vunpack.c.l.b16 %v93
  %v1013 = vunpack.c.l.b16 %v94
  %v1014 = vunpack.c.l.b16 %v95
  %v1015 = vunpack.c.l.b16 %v96
  %v1016 = vunpack.c.l.b16 %v97
  %v1017 = vunpack.c.l.b16 %v98
  %v1018 = vunpack.c.l.b16 %v99
  %v1019 = vunpack.c.l.b16 %v100
  %v1020 = vunpack.c.l.b16 %v101
  %v1021 = vunpack.c.l.b16 %v102
  %v1022 = vunpack.c.l.b16 %v103
  %v1023 = vunpack.c.l.b16 %v104
  %v1024 = vunpack.c.l.b16 %v105
  %v1025 = vunpack.c.l.b16 %v106
  %v1026 = vunpack.c.l.b16 %v107
  %v1027 = vpack.c.b16 %v964, %v963
  %v1028 = vpack.c.b16 %v966, %v965
  %v1029 = vpack.c.b16 %v968, %v967
  %v1030 = vpack.c.b16 %v970, %v969
  %v1031 = vpack.c.b16 %v972, %v971
  %v1032 = vpack.c.b16 %v974, %v973
  %v1033 = vpack.c.b16 %v976, %v975
  %v1034 = vpack.c.b16 %v978, %v977
  %v1035 = vpack.c.b16 %v980, %v979
  %v1036 = vpack.c.b16 %v982, %v981
  %v1037 = vpack.c.b16 %v984, %v983
  %v1038 = vpack.c.b16 %v986, %v985
  %v1039 = vpack.c.b16 %v988, %v987
  %v1040 = vpack.c.b16 %v990, %v989
  %v1041 = vpack.c.b16 %v992, %v991
  %v1042 = vpack.c.b16 %v994, %v993
  %v1043 = vpack.c.b16 %v996, %v995
  %v1044 = vpack.c.b16 %v998, %v997
  %v1045 = vpack.c.b16 %v1000, %v999
  %v1046 = vpack.c.b16 %v1002, %v1001
  %v1047 = vpack.c.b16 %v1004, %v1003
  %v1048 = vpack.c.b16 %v1006, %v1005
  %v1049 = vpack.c.b16 %v1008, %v1007
  %v1050 = vpack.c.b16 %v1010, %v1009
  %v1051 = vpack.c.b16 %v1012, %v1011
  %v1052 = vpack.c.b16 %v1014, %v1013
  %v1053 = vpack.c.b16 %v1016, %v1015
  %v1054 = vpack.c.b16 %v1018, %v1017
  %v1055 = vpack.c.b16 %v1020, %v1019
  %v1056 = vpack.c.b16 %v1022, %v1021
  %v1057 = vpack.c.b16 %v1024, %v1023
  %v1058 = vpack.c.b16 %v1026, %v1025
  %1091 = vmatprep.subr.bf16.mxu0 0
  %1092 = vmatpush1.bf16.msra.mxu0 %v1027
  %1093 = vmatprep.subr.bf16.mxu0 0
  %1094 = vmatpush1.bf16.msra.mxu0 %v1028
  %1095 = vmatprep.subr.bf16.mxu0 0
  %1096 = vmatpush1.bf16.msra.mxu0 %v1029
  %1097 = vmatprep.subr.bf16.mxu0 0
  %1098 = vmatpush1.bf16.msra.mxu0 %v1030
  %1099 = vmatprep.subr.bf16.mxu0 0
  %1100 = vmatpush1.bf16.msra.mxu0 %v1031
  %1101 = vmatprep.subr.bf16.mxu0 0
  %1102 = vmatpush1.bf16.msra.mxu0 %v1032
  %1103 = vmatprep.subr.bf16.mxu0 0
  %1104 = vmatpush1.bf16.msra.mxu0 %v1033
  %1105 = vmatprep.subr.bf16.mxu0 0
  %1106 = vmatpush1.bf16.msra.mxu0 %v1034
  %1107 = vmatprep.subr.bf16.mxu0 0
  %1108 = vmatpush1.bf16.msra.mxu0 %v1035
  %1109 = vmatprep.subr.bf16.mxu0 0
  %1110 = vmatpush1.bf16.msra.mxu0 %v1036
  %1111 = vmatprep.subr.bf16.mxu0 0
  %1112 = vmatpush1.bf16.msra.mxu0 %v1037
  %1113 = vmatprep.subr.bf16.mxu0 0
  %1114 = vmatpush1.bf16.msra.mxu0 %v1038
  %1115 = vmatprep.subr.bf16.mxu0 0
  %1116 = vmatpush1.bf16.msra.mxu0 %v1039
  %1117 = vmatprep.subr.bf16.mxu0 0
  %1118 = vmatpush1.bf16.msra.mxu0 %v1040
  %1119 = vmatprep.subr.bf16.mxu0 0
  %1120 = vmatpush1.bf16.msra.mxu0 %v1041
  %1121 = vmatprep.subr.bf16.mxu0 0
  %1122 = vmatpush1.bf16.msra.mxu0 %v1042
  %1123 = vmatprep.mubr.bf16.mxu0 %v896
  %1124 = vmatmul.mubr.bf16.gmra.mrb[0].mxu0 %v895
  %v1125 = vpop.f32.mrb[0].mxu0
  %v1126 = vadd.f32 0.0, %v1125
  %v1127 = vpop.f32.mrb[0].mxu0
  %v1128 = vpop.f32.mrb[0].mxu0
  %v1129 = vpop.f32.mrb[0].mxu0
  %1130 = vdwg.mxu0
  %1131 = vmatprep.subr.bf16.mxu0 0
  %1132 = vmatpush1.bf16.msra.mxu0 %v1043
  %1133 = vmatprep.subr.bf16.mxu0 0
  %1134 = vmatpush1.bf16.msra.mxu0 %v1044
  %1135 = vmatprep.subr.bf16.mxu0 0
  %1136 = vmatpush1.bf16.msra.mxu0 %v1045
  %1137 = vmatprep.subr.bf16.mxu0 0
  %1138 = vmatpush1.bf16.msra.mxu0 %v1046
  %1139 = vmatprep.subr.bf16.mxu0 0
  %1140 = vmatpush1.bf16.msra.mxu0 %v1047
  %1141 = vmatprep.subr.bf16.mxu0 0
  %1142 = vmatpush1.bf16.msra.mxu0 %v1048
  %1143 = vmatprep.subr.bf16.mxu0 0
  %1144 = vmatpush1.bf16.msra.mxu0 %v1049
  %1145 = vmatprep.subr.bf16.mxu0 0
  %1146 = vmatpush1.bf16.msra.mxu0 %v1050
  %1147 = vmatprep.subr.bf16.mxu0 0
  %1148 = vmatpush1.bf16.msra.mxu0 %v1051
  %1149 = vmatprep.subr.bf16.mxu0 0
  %1150 = vmatpush1.bf16.msra.mxu0 %v1052
  %1151 = vmatprep.subr.bf16.mxu0 0
  %1152 = vmatpush1.bf16.msra.mxu0 %v1053
  %1153 = vmatprep.subr.bf16.mxu0 0
  %1154 = vmatpush1.bf16.msra.mxu0 %v1054
  %1155 = vmatprep.subr.bf16.mxu0 0
  %1156 = vmatpush1.bf16.msra.mxu0 %v1055
  %1157 = vmatprep.subr.bf16.mxu0 0
  %1158 = vmatpush1.bf16.msra.mxu0 %v1056
  %1159 = vmatprep.subr.bf16.mxu0 0
  %1160 = vmatpush1.bf16.msra.mxu0 %v1057
  %1161 = vmatprep.subr.bf16.mxu0 0
  %1162 = vmatpush1.bf16.msra.mxu0 %v1058
  %1163 = vmatprep.mubr.bf16.mxu0 %v898
  %1164 = vmatmul.mubr.bf16.gmra.mrb[0].mxu0 %v897
  %v1165 = vpop.f32.mrb[0].mxu0
  %v1166 = vadd.f32 %v1126, %v1165
  %v1167 = vpop.f32.mrb[0].mxu0
  %v1168 = vpop.f32.mrb[0].mxu0
  %v1169 = vpop.f32.mrb[0].mxu0
  %1170 = vdwg.mxu0
  %v1171 = vld [vmem:[%s8] sm:$0xff]
  %v1172 = vld [vmem:[%s8 + $0x8] sm:$0xff]
  %v1173 = vld [vmem:[%s8 + $0x10] sm:$0xff]
  %v1174 = vld [vmem:[%s8 + $0x18] sm:$0xff]
  %1176 = vset.pattern.permute.xlu0 0
  %1177 = vperm.xlu0 %1176, %v1171
  %v1178 = vpop.permute.xlu0 %1177
  %v1180 = vmul.f32 %v1166, %v1178
  %1182 = vset.pattern.permute.xlu0 0
  %1183 = vperm.xlu0 %1182, %v1172
  %v1184 = vpop.permute.xlu0 %1183
  %v1186 = vadd.f32 %v1180, %v1184
  %v1187 = vmax.f32 %v1186, 0.0
  %1188 = vrot.lane.b32.xlu0 %v1187, 9
  %v1189 = vpop.permute.xlu0 %1188
  %v1190 = vlaneseq
  %v1191 = vshrl.u32 %v1190, 7
  %v1192 = vsub.s32 0, %v1191
  %v1193 = vrot.slane %v43, %v1192
  %v1194 = vmul.f32 %v1189, %v1193
  %1195 = vrot.lane.b32.xlu0 %v1187, 8
  %v1196 = vpop.permute.xlu0 %1195
  %v1197 = vlaneseq
  %v1198 = vshrl.u32 %v1197, 7
  %v1199 = vsub.s32 1, %v1198
  %v1200 = vrot.slane %v43, %v1199
  %v1201 = vmul.f32 %v1196, %v1200
  %1202 = vrot.lane.b32.xlu0 %v1187, 7
  %v1203 = vpop.permute.xlu0 %1202
  %v1204 = vlaneseq
  %v1205 = vshrl.u32 %v1204, 7
  %v1206 = vsub.s32 2, %v1205
  %v1207 = vrot.slane %v43, %v1206
  %v1208 = vmul.f32 %v1203, %v1207
  %1209 = vrot.lane.b32.xlu0 %v1187, 1
  %v1210 = vpop.permute.xlu0 %1209
  %v1211 = vlaneseq
  %v1212 = vshrl.u32 %v1211, 7
  %v1213 = vsub.s32 3, %v1212
  %v1214 = vrot.slane %v43, %v1213
  %v1215 = vmul.f32 %v1210, %v1214
  %1216 = vrot.lane.b32.xlu0 %v1187, 127
  %v1217 = vpop.permute.xlu0 %1216
  %v1218 = vlaneseq
  %v1219 = vshrl.u32 %v1218, 7
  %v1220 = vsub.s32 4, %v1219
  %v1221 = vrot.slane %v43, %v1220
  %v1222 = vmul.f32 %v1217, %v1221
  %1223 = vrot.lane.b32.xlu0 %v1187, 121
  %v1224 = vpop.permute.xlu0 %1223
  %v1225 = vlaneseq
  %v1226 = vshrl.u32 %v1225, 7
  %v1227 = vsub.s32 5, %v1226
  %v1228 = vrot.slane %v43, %v1227
  %v1229 = vmul.f32 %v1224, %v1228
  %1230 = vrot.lane.b32.xlu0 %v1187, 120
  %v1231 = vpop.permute.xlu0 %1230
  %v1232 = vlaneseq
  %v1233 = vshrl.u32 %v1232, 7
  %v1234 = vsub.s32 6, %v1233
  %v1235 = vrot.slane %v43, %v1234
  %v1236 = vmul.f32 %v1231, %v1235
  %1237 = vrot.lane.b32.xlu0 %v1187, 119
  %v1238 = vpop.permute.xlu0 %1237
  %v1239 = vlaneseq
  %v1240 = vshrl.u32 %v1239, 7
  %v1241 = vsub.s32 7, %v1240
  %v1242 = vrot.slane %v43, %v1241
  %v1243 = vmul.f32 %v1238, %v1242
  %v1244 = vpack.c.bf16 %v1201, %v1194
  %v1245 = vpack.c.bf16 %v1215, %v1208
  %v1246 = vpack.c.bf16 %v1222, %v1187
  %v1247 = vpack.c.bf16 %v1236, %v1229
  %v1248 = vpack.c.bf16 %v1243, %v1243
  %v1249 = vld [vmem:[%s9] sm:$0xf]
  %v1251 = vsel %vm425, %v1249, 0
  %v1254 = vsel %vm429, %v1248, 0
  %1256 = vmatprep.subr.bf16.mxu0 0
  %1257 = vmatpush1.bf16.msra.mxu0 %v1244
  %1258 = vmatprep.subr.bf16.mxu0 0
  %1259 = vmatpush1.bf16.msra.mxu0 %v1245
  %1260 = vmatprep.subr.bf16.mxu0 0
  %1261 = vmatpush1.bf16.msra.mxu0 %v1246
  %1262 = vmatprep.subr.bf16.mxu0 0
  %1263 = vmatpush1.bf16.msra.mxu0 %v1247
  %1264 = vmatprep.subr.bf16.mxu0 0
  %1265 = vmatpush1.bf16.msra.mxu0 %v1254
  %1266 = vmatprep.subr.bf16.mxu0 0
  %1267 = vmatpush1.bf16.msra.mxu0 0
  %1268 = vmatprep.subr.bf16.mxu0 0
  %1269 = vmatpush1.bf16.msra.mxu0 0
  %1270 = vmatprep.subr.bf16.mxu0 0
  %1271 = vmatpush1.bf16.msra.mxu0 0
  %1272 = vmatprep.subr.bf16.mxu0 0
  %1273 = vmatpush1.bf16.msra.mxu0 0
  %1274 = vmatprep.subr.bf16.mxu0 0
  %1275 = vmatpush1.bf16.msra.mxu0 0
  %1276 = vmatprep.subr.bf16.mxu0 0
  %1277 = vmatpush1.bf16.msra.mxu0 0
  %1278 = vmatprep.subr.bf16.mxu0 0
  %1279 = vmatpush1.bf16.msra.mxu0 0
  %1280 = vmatprep.subr.bf16.mxu0 0
  %1281 = vmatpush1.bf16.msra.mxu0 0
  %1282 = vmatprep.subr.bf16.mxu0 0
  %1283 = vmatpush1.bf16.msra.mxu0 0
  %1284 = vmatprep.subr.bf16.mxu0 0
  %1285 = vmatpush1.bf16.msra.mxu0 0
  %1286 = vmatprep.subr.bf16.mxu0 0
  %1287 = vmatpush1.bf16.msra.mxu0 0
  %1288 = vmatprep.mubr.bf16.mxu0 0
  %1289 = vmatmul.mubr.bf16.gmra.mrb[0].mxu0 %v1251
  %v1290 = vpop.f32.mrb[0].mxu0
  %v1291 = vadd.f32 0.0, %v1290
  %v1292 = vpop.f32.mrb[0].mxu0
  %v1293 = vpop.f32.mrb[0].mxu0
  %v1294 = vpop.f32.mrb[0].mxu0
  %1295 = vdwg.mxu0
  %1297 = vset.pattern.permute.xlu0 0
  %1298 = vperm.xlu0 %1297, %v1173
  %v1299 = vpop.permute.xlu0 %1298
  %v1301 = vmul.f32 %v1291, %v1299
  %1303 = vset.pattern.permute.xlu0 0
  %1304 = vperm.xlu0 %1303, %v1174
  %v1305 = vpop.permute.xlu0 %1304
  %v1307 = vadd.f32 %v1301, %v1305
  %v1308 = vmax.f32 %v1307, 0.0
  %1309 = vrot.lane.b32.xlu0 %v1308, 9
  %v1310 = vpop.permute.xlu0 %1309
  %v1311 = vmul.f32 %v1310, %v1193
  %1312 = vrot.lane.b32.xlu0 %v1308, 8
  %v1313 = vpop.permute.xlu0 %1312
  %v1314 = vmul.f32 %v1313, %v1200
  %1315 = vrot.lane.b32.xlu0 %v1308, 7
  %v1316 = vpop.permute.xlu0 %1315
  %v1317 = vmul.f32 %v1316, %v1207
  %1318 = vrot.lane.b32.xlu0 %v1308, 1
  %v1319 = vpop.permute.xlu0 %1318
  %v1320 = vmul.f32 %v1319, %v1214
  %1321 = vrot.lane.b32.xlu0 %v1308, 127
  %v1322 = vpop.permute.xlu0 %1321
  %v1323 = vmul.f32 %v1322, %v1221
  %1324 = vrot.lane.b32.xlu0 %v1308, 121
  %v1325 = vpop.permute.xlu0 %1324
  %v1326 = vmul.f32 %v1325, %v1228
  %1327 = vrot.lane.b32.xlu0 %v1308, 120
  %v1328 = vpop.permute.xlu0 %1327
  %v1329 = vmul.f32 %v1328, %v1235
  %1330 = vrot.lane.b32.xlu0 %v1308, 119
  %v1331 = vpop.permute.xlu0 %1330
  %v1332 = vmul.f32 %v1331, %v1242
  %v1333 = vpack.c.bf16 %v1314, %v1311
  %v1334 = vpack.c.bf16 %v1320, %v1317
  %v1335 = vpack.c.bf16 %v1323, %v1308
  %v1336 = vpack.c.bf16 %v1329, %v1326
  %v1337 = vpack.c.bf16 %v1332, %v1332
  %v1338 = vld [vmem:[%s10] sm:$0xf]
  %v1340 = vsel %vm425, %v1338, 0
  %v1343 = vsel %vm429, %v1337, 0
  %1345 = vmatprep.subr.bf16.mxu0 0
  %1346 = vmatpush1.bf16.msra.mxu0 %v1333
  %1347 = vmatprep.subr.bf16.mxu0 0
  %1348 = vmatpush1.bf16.msra.mxu0 %v1334
  %1349 = vmatprep.subr.bf16.mxu0 0
  %1350 = vmatpush1.bf16.msra.mxu0 %v1335
  %1351 = vmatprep.subr.bf16.mxu0 0
  %1352 = vmatpush1.bf16.msra.mxu0 %v1336
  %1353 = vmatprep.subr.bf16.mxu0 0
  %1354 = vmatpush1.bf16.msra.mxu0 %v1343
  %1355 = vmatprep.subr.bf16.mxu0 0
  %1356 = vmatpush1.bf16.msra.mxu0 0
  %1357 = vmatprep.subr.bf16.mxu0 0
  %1358 = vmatpush1.bf16.msra.mxu0 0
  %1359 = vmatprep.subr.bf16.mxu0 0
  %1360 = vmatpush1.bf16.msra.mxu0 0
  %1361 = vmatprep.subr.bf16.mxu0 0
  %1362 = vmatpush1.bf16.msra.mxu0 0
  %1363 = vmatprep.subr.bf16.mxu0 0
  %1364 = vmatpush1.bf16.msra.mxu0 0
  %1365 = vmatprep.subr.bf16.mxu0 0
  %1366 = vmatpush1.bf16.msra.mxu0 0
  %1367 = vmatprep.subr.bf16.mxu0 0
  %1368 = vmatpush1.bf16.msra.mxu0 0
  %1369 = vmatprep.subr.bf16.mxu0 0
  %1370 = vmatpush1.bf16.msra.mxu0 0
  %1371 = vmatprep.subr.bf16.mxu0 0
  %1372 = vmatpush1.bf16.msra.mxu0 0
  %1373 = vmatprep.subr.bf16.mxu0 0
  %1374 = vmatpush1.bf16.msra.mxu0 0
  %1375 = vmatprep.subr.bf16.mxu0 0
  %1376 = vmatpush1.bf16.msra.mxu0 0
  %1377 = vmatprep.mubr.bf16.mxu0 0
  %1378 = vmatmul.mubr.bf16.gmra.mrb[0].mxu0 %v1340
  %v1379 = vpop.f32.mrb[0].mxu0
  %v1380 = vadd.f32 0.0, %v1379
  %v1381 = vpop.f32.mrb[0].mxu0
  %v1382 = vpop.f32.mrb[0].mxu0
  %v1383 = vpop.f32.mrb[0].mxu0
  %1384 = vdwg.mxu0
  %v1385 = vadd.f32 %v1166, %v1380
  %1386 = vst [vmem:[%s11] sm:$0xff] %v1385
  // Predicated region
  $region46: #{resnet_group_forward.1} parent=0 // pred_check
    _
  $region47: #{resnet_group_forward.1} parent=0 // pred_check_branch
    %1388 = sbr.rel (0) target = $region49
  $region48: #{resnet_group_forward.1} parent=0 // pred_region
    _
  $region49: #{resnet_group_forward.1} parent=0 // pred_fallthru
    _
  // Predicated region
  $region50: #{resnet_group_forward.1} parent=0 // pred_check
    _
  $region51: #{resnet_group_forward.1} parent=0 // pred_check_branch
    %1390 = sbr.rel (0) target = $region53
  $region52: #{resnet_group_forward.1} parent=0 // pred_region
    _
  $region53: #{resnet_group_forward.1} parent=0 // pred_fallthru
    _

</llo_original>
